<compile_context>
chip_gen: v6e
topology: v6e:2x2x1
jax: 0.10.0
libtpu: 0.0.40
codegen_flags: <defaults>
</compile_context>

<pallas_src>
import math
from functools import partial

import jax
import jax.numpy as jnp
from jax import lax
from jax.experimental import pallas as pl
from jax.experimental.pallas import tpu as pltpu

# ----------------------------- model config (small, GPT-2-shaped) ------------
HIDDEN = 32
N_LAYERS = 2
N_HEADS = 2
MAX_SEQ = 16
VOCAB = 128
SEQ = 8
BATCH = 2
LN_EPS = 1e-5
NEG_BIG = -1e9                      # finite masked value (no -inf arithmetic)
GELU_C = math.sqrt(2.0 / math.pi)   # GPT-2 "gelu_new" (tanh approximation)


def _bf16_transcendentals_ok():
    """bf16 VPU/EUP exists on v6e/v7x; keep f32 transcendentals on v5 and older."""
    try:
        kind = jax.devices()[0].device_kind.lower()
    except Exception:
        return False
    if "tpu" not in kind:
        return False
    return not any(old in kind for old in ("v2", "v3", "v4", "v5"))


COMPUTE_DTYPE = jnp.bfloat16 if _bf16_transcendentals_ok() else jnp.float32


def _layernorm(x, g, b):
    mu = jnp.mean(x, axis=-1, keepdims=True)
    var = jnp.mean((x - mu) ** 2, axis=-1, keepdims=True)
    return (x - mu) * lax.rsqrt(var + LN_EPS) * g + b


# ----------------------------- fused forward kernel --------------------------
def gpt_fused_kernel(ids_ref, amask_ref, wte_ref, wpe_ref,
                     wqkv_ref, wao_ref, wfc_ref, wpr_ref,
                     small_ref, wtet_ref, out_ref,
                     *, n_layers, n_head, batch, seq, act_dtype):
    V, H = wte_ref.shape
    N = batch * seq
    hd = H // n_head
    bf16 = jnp.bfloat16

    # ---- fused embedding: one-hot gather on the MXU + positional add --------
    ids = ids_ref[...]                                                # (B, S) i32
    iota_v = lax.broadcasted_iota(jnp.int32, (batch, seq, V), 2)
    onehot = jnp.where(ids[:, :, None] == iota_v, 1.0, 0.0)           # (B, S, V) f32
    x = jnp.dot(onehot.reshape(N, V).astype(bf16), wte_ref[...],
                preferred_element_type=jnp.float32)                   # (N, H) f32
    pe = wpe_ref[0:seq, :]                                            # (S, H) f32
    x = (x.reshape(batch, seq, H) + pe[None, :, :]).reshape(N, H)

    # ---- combined causal + padding bias, built ONCE (loop-invariant) --------
    pad = jnp.where(amask_ref[...] > 0, 0.0, NEG_BIG)                 # (B, S) f32
    row = lax.broadcasted_iota(jnp.int32, (seq, seq), 0)
    col = lax.broadcasted_iota(jnp.int32, (seq, seq), 1)
    causal = col <= row                                               # (S, S) bool
    bias = jnp.where(causal[None, :, :], pad[:, None, :], NEG_BIG)    # (B, S, S)
    bias_g = jnp.concatenate([bias] * n_head, axis=0)                 # (nh*B, S, S)

    sp = small_ref[...]                                               # (4L+1, 4H) f32

    for li in range(n_layers):                                        # static unroll
        base = 4 * li
        b_qkv = sp[base:base + 1, 0:3 * H]
        b_fc = sp[base + 1:base + 2, 0:4 * H]
        ln1_g = sp[base + 2:base + 3, 0:H]
        ln1_b = sp[base + 2:base + 3, H:2 * H]
        ln2_g = sp[base + 2:base + 3, 2 * H:3 * H]
        ln2_b = sp[base + 2:base + 3, 3 * H:4 * H]
        b_ao = sp[base + 3:base + 4, 0:H]
        b_pr = sp[base + 3:base + 4, H:2 * H]

        # ----- attention (1/sqrt(hd) pre-folded into W_q / b_q) -----
        xn = _layernorm(x, ln1_g, ln1_b)
        qkv = jnp.dot(xn.astype(bf16), wqkv_ref[li],
                      preferred_element_type=jnp.float32) + b_qkv     # (N, 3H)
        qkv = qkv.reshape(batch, seq, 3 * H)
        q, k, v = qkv[..., 0:H], qkv[..., H:2 * H], qkv[..., 2 * H:3 * H]

        # fold heads into the leading batch dim: ONE scores matmul, ONE softmax,
        # ONE PV matmul for all heads (slices/concats are layout-only).
        qg = jnp.concatenate([q[..., hi * hd:(hi + 1) * hd] for hi in range(n_head)], axis=0)
        kg = jnp.concatenate([k[..., hi * hd:(hi + 1) * hd] for hi in range(n_head)], axis=0)
        vg = jnp.concatenate([v[..., hi * hd:(hi + 1) * hd] for hi in range(n_head)], axis=0)

        s = jnp.einsum('gqd,gkd->gqk', qg.astype(bf16), kg.astype(bf16),
                       preferred_element_type=jnp.float32)            # (nh*B, S, S)
        s = s + bias_g
        m = jnp.max(s, axis=-1, keepdims=True)                        # f32 max-subtract
        p = jnp.exp((s - m).astype(act_dtype))                        # bf16 EUP on v6e/v7x
        denom = jnp.sum(p.astype(jnp.float32), axis=-1, keepdims=True)
        og = jnp.einsum('gqk,gkd->gqd', p.astype(bf16), vg.astype(bf16),
                        preferred_element_type=jnp.float32)           # (nh*B, S, hd)
        og = og * pl.reciprocal(denom, approx=True)

        # merge heads back into lane-contiguous (N, H); ONE output projection.
        merged = jnp.concatenate(
            [og[hi * batch:(hi + 1) * batch] for hi in range(n_head)], axis=-1)  # (B,S,H)
        att_in = merged.reshape(N, H)
        x = x + jnp.dot(att_in.astype(bf16), wao_ref[li],
                        preferred_element_type=jnp.float32) + b_ao

        # ----- MLP (GPT-2 "gelu_new") -----
        xn2 = _layernorm(x, ln2_g, ln2_b)
        hmid = jnp.dot(xn2.astype(bf16), wfc_ref[li],
                       preferred_element_type=jnp.float32) + b_fc     # (N, 4H)
        hg = hmid.astype(act_dtype)
        act = 0.5 * hg * (1.0 + jnp.tanh(GELU_C * (hg + 0.044715 * hg * hg * hg)))
        x = x + jnp.dot(act.astype(bf16), wpr_ref[li],
                        preferred_element_type=jnp.float32) + b_pr

    # ---- final LN + tied LM head (pre-transposed weight, lane-dense V=128) --
    lbase = 4 * n_layers
    lnf_g = sp[lbase:lbase + 1, 0:H]
    lnf_b = sp[lbase:lbase + 1, H:2 * H]
    xf = _layernorm(x, lnf_g, lnf_b)
    out_ref[...] = jnp.dot(xf.astype(bf16), wtet_ref[...],
                           preferred_element_type=jnp.float32)        # (N, V)


# ----------------------------- full forward ----------------------------------
@jax.jit
def gpt_lm_forward(params, input_ids, attention_mask):
    B, S = input_ids.shape
    V = params['wte_t'].shape[1]

    kernel = partial(gpt_fused_kernel, n_layers=N_LAYERS, n_head=N_HEADS,
                     batch=B, seq=S, act_dtype=COMPUTE_DTYPE)
    logits = pl.pallas_call(
        kernel,
        out_shape=jax.ShapeDtypeStruct((B * S, V), jnp.float32),      # lane-dense slab
        compiler_params=pltpu.CompilerParams(vmem_limit_bytes=4 * 1024 * 1024),
    )(input_ids.astype(jnp.int32), attention_mask.astype(jnp.int32),
      params['wte_emb'], params['wpe'],
      params['w_qkv'], params['w_ao'], params['w_fc'], params['w_pr'],
      params['small'], params['wte_t'])
    return logits.reshape(B, S, V)


# ----------------------------- deterministic init -----------------------------
def init_params(key):
    std = 0.02
    inner = 4 * HIDDEN
    hd = HIDDEN // N_HEADS
    scale = 1.0 / math.sqrt(hd)
    keys = jax.random.split(key, 2 + 4 * N_LAYERS)

    wte = std * jax.random.normal(keys[0], (VOCAB, HIDDEN), jnp.float32)
    wpe = std * jax.random.normal(keys[1], (MAX_SEQ, HIDDEN), jnp.float32)

    w_qkv, w_ao, w_fc, w_pr = [], [], [], []
    for li in range(N_LAYERS):
        k0, k1, k2, k3 = keys[2 + 4 * li: 6 + 4 * li]
        w_qkv.append(std * jax.random.normal(k0, (HIDDEN, 3 * HIDDEN), jnp.float32))
        w_ao.append(std * jax.random.normal(k1, (HIDDEN, HIDDEN), jnp.float32))
        w_fc.append(std * jax.random.normal(k2, (HIDDEN, inner), jnp.float32))
        w_pr.append(std * jax.random.normal(k3, (inner, HIDDEN), jnp.float32))

    w_qkv = jnp.stack(w_qkv)                                          # (L, H, 3H) f32
    # fold the 1/sqrt(hd) attention scale into the Q columns (and Q bias below)
    w_qkv = w_qkv.at[:, :, :HIDDEN].multiply(scale)

    b_qkv = jnp.zeros((N_LAYERS, 3 * HIDDEN), jnp.float32)
    b_qkv = b_qkv.at[:, :HIDDEN].multiply(scale)                      # zero; kept for generality
    b_ao = jnp.zeros((N_LAYERS, HIDDEN), jnp.float32)
    b_fc = jnp.zeros((N_LAYERS, inner), jnp.float32)
    b_pr = jnp.zeros((N_LAYERS, HIDDEN), jnp.float32)
    ones = jnp.ones((N_LAYERS, HIDDEN), jnp.float32)
    zeros = jnp.zeros((N_LAYERS, HIDDEN), jnp.float32)

    # pack the six tiny bias/LN operands into ONE lane-padded f32 slab (4L+1, 4H):
    #   row 4l+0: [b_qkv | 0]      row 4l+1: [b_fc]
    #   row 4l+2: [ln1_g|ln1_b|ln2_g|ln2_b]   row 4l+3: [b_ao|b_pr|0|0]
    #   row 4L  : [lnf_g|lnf_b|0|0]
    row0 = jnp.concatenate([b_qkv, zeros], axis=1)                    # (L, 4H)
    row1 = b_fc                                                       # (L, 4H)
    row2 = jnp.concatenate([ones, zeros, ones, zeros], axis=1)        # (L, 4H)
    row3 = jnp.concatenate([b_ao, b_pr, zeros, zeros], axis=1)        # (L, 4H)
    per_layer = jnp.stack([row0, row1, row2, row3], axis=1).reshape(4 * N_LAYERS, 4 * HIDDEN)
    lnf_row = jnp.concatenate([jnp.ones((HIDDEN,), jnp.float32),
                               jnp.zeros((3 * HIDDEN,), jnp.float32)])[None, :]
    small = jnp.concatenate([per_layer, lnf_row], axis=0)             # (4L+1, 4H)

    return {
        'wte_emb': wte.astype(jnp.bfloat16),                          # (V, H)  embedding side
        'wte_t': wte.T.astype(jnp.bfloat16),                          # (H, V)  tied LM head (pre-transposed once)
        'wpe': wpe,                                                   # (MAX_SEQ, H) f32
        'w_qkv': w_qkv.astype(jnp.bfloat16),                          # (L, H, 3H)
        'w_ao': jnp.stack(w_ao).astype(jnp.bfloat16),                 # (L, H, H)
        'w_fc': jnp.stack(w_fc).astype(jnp.bfloat16),                 # (L, H, 4H)
        'w_pr': jnp.stack(w_pr).astype(jnp.bfloat16),                 # (L, 4H, H)
        'small': small,                                               # (4L+1, 4H) f32
    }


if __name__ == "__main__":
    key = jax.random.PRNGKey(0)
    pkey, dkey = jax.random.split(key)
    params = init_params(pkey)

    input_ids = jax.random.randint(dkey, (BATCH, SEQ), 0, VOCAB, dtype=jnp.int32)
    attention_mask = jnp.ones((BATCH, SEQ), dtype=jnp.int32)

    # TODO(synk): dropout / gradient checkpointing are training-only and are
    # identity in this eval-mode forward.
    logits = gpt_lm_forward(params, input_ids, attention_mask)
    jax.block_until_ready(logits)
    assert logits.shape == (BATCH, SEQ, VOCAB), logits.shape
    assert bool(jnp.all(jnp.isfinite(logits)))
    print("KERNEL_OK")
</pallas_src>

<mosaic_0001>
module attributes {stable_mosaic.version = 11 : i64} {
  func.func @gpt_fused_kernel(%arg0: memref<2x8xi32, #tpu.memory_space<vmem>>, %arg1: memref<2x8xi32, #tpu.memory_space<vmem>>, %arg2: memref<128x32xbf16, #tpu.memory_space<vmem>>, %arg3: memref<16x32xf32, #tpu.memory_space<vmem>>, %arg4: memref<2x32x96xbf16, #tpu.memory_space<vmem>>, %arg5: memref<2x32x32xbf16, #tpu.memory_space<vmem>>, %arg6: memref<2x32x128xbf16, #tpu.memory_space<vmem>>, %arg7: memref<2x128x32xbf16, #tpu.memory_space<vmem>>, %arg8: memref<9x128xf32, #tpu.memory_space<vmem>>, %arg9: memref<32x128xbf16, #tpu.memory_space<vmem>>, %arg10: memref<16x128xf32, #tpu.memory_space<vmem>>) attributes {dimension_semantics = [], scalar_prefetch = 0 : i64, scratch_operands = 0 : i64, tpu.core_type = #tpu.core_type<tc>} {
    %c0 = arith.constant 0 : index
    %c0_0 = arith.constant 0 : index
    %0 = vector.load %arg0[%c0, %c0_0] : memref<2x8xi32, #tpu.memory_space<vmem>>, vector<2x8xi32>
    %1 = tpu.iota {dimensions = array<i32: 2>} : vector<2x8x128xi32>
    %2 = vector.shape_cast %0 : vector<2x8xi32> to vector<2x8x1xi32>
    %3 = vector.broadcast %2 : vector<2x8x1xi32> to vector<2x8x128xi32>
    %4 = arith.cmpi eq, %3, %1 : vector<2x8x128xi32>
    %cst = arith.constant 1.000000e+00 : f32
    %cst_1 = arith.constant 0.000000e+00 : f32
    %5 = vector.broadcast %cst : f32 to vector<2x8x128xf32>
    %6 = vector.broadcast %cst_1 : f32 to vector<2x8x128xf32>
    %7 = arith.select %4, %5, %6 : vector<2x8x128xi1>, vector<2x8x128xf32>
    %8 = vector.shape_cast %7 : vector<2x8x128xf32> to vector<16x128xf32>
    %9 = arith.truncf %8 : vector<16x128xf32> to vector<16x128xbf16>
    %c0_2 = arith.constant 0 : index
    %c0_3 = arith.constant 0 : index
    %10 = vector.load %arg2[%c0_2, %c0_3] : memref<128x32xbf16, #tpu.memory_space<vmem>>, vector<128x32xbf16>
    %cst_4 = arith.constant dense<0.000000e+00> : vector<16x32xf32>
    %11 = tpu.matmul %9, %10, %cst_4 {dimension_numbers = #tpu.dot_dimension_numbers<[1], [0], [0], [1], [0, 0, 1, 1], [], []>} : vector<16x128xbf16>, vector<128x32xbf16>, vector<16x32xf32> -> vector<16x32xf32>
    %c0_5 = arith.constant 0 : index
    %c0_6 = arith.constant 0 : index
    %12 = vector.load %arg3[%c0_5, %c0_6] : memref<16x32xf32, #tpu.memory_space<vmem>>, vector<8x32xf32>
    %13 = vector.shape_cast %11 : vector<16x32xf32> to vector<2x8x32xf32>
    %14 = vector.shape_cast %12 : vector<8x32xf32> to vector<1x8x32xf32>
    %15 = vector.broadcast %14 : vector<1x8x32xf32> to vector<2x8x32xf32>
    %16 = arith.addf %13, %15 : vector<2x8x32xf32>
    %17 = vector.shape_cast %16 : vector<2x8x32xf32> to vector<16x32xf32>
    %c0_7 = arith.constant 0 : index
    %c0_8 = arith.constant 0 : index
    %18 = vector.load %arg1[%c0_7, %c0_8] : memref<2x8xi32, #tpu.memory_space<vmem>>, vector<2x8xi32>
    %c0_i32 = arith.constant 0 : i32
    %19 = vector.broadcast %c0_i32 : i32 to vector<2x8xi32>
    %20 = arith.cmpi sgt, %18, %19 : vector<2x8xi32>
    %cst_9 = arith.constant 0.000000e+00 : f32
    %cst_10 = arith.constant -1.000000e+09 : f32
    %21 = vector.broadcast %cst_9 : f32 to vector<2x8xf32>
    %22 = vector.broadcast %cst_10 : f32 to vector<2x8xf32>
    %23 = arith.select %20, %21, %22 : vector<2x8xi1>, vector<2x8xf32>
    %24 = tpu.iota {dimensions = array<i32: 0>} : vector<8x8xi32>
    %25 = tpu.iota {dimensions = array<i32: 1>} : vector<8x8xi32>
    %26 = arith.cmpi sle, %25, %24 : vector<8x8xi32>
    %27 = vector.shape_cast %26 : vector<8x8xi1> to vector<1x8x8xi1>
    %28 = vector.shape_cast %23 : vector<2x8xf32> to vector<2x1x8xf32>
    %cst_11 = arith.constant -1.000000e+09 : f32
    %29 = vector.shape_cast %27 : vector<1x8x8xi1> to vector<1x8x8xi1>
    %30 = vector.broadcast %29 : vector<1x8x8xi1> to vector<2x8x8xi1>
    %31 = vector.shape_cast %28 : vector<2x1x8xf32> to vector<2x1x8xf32>
    %32 = vector.broadcast %31 : vector<2x1x8xf32> to vector<2x8x8xf32>
    %33 = vector.broadcast %cst_11 : f32 to vector<2x8x8xf32>
    %34 = arith.select %30, %32, %33 : vector<2x8x8xi1>, vector<2x8x8xf32>
    %35 = tpu.concatenate %34, %34 in 0 : vector<2x8x8xf32>, vector<2x8x8xf32> -> vector<4x8x8xf32>
    %c0_12 = arith.constant 0 : index
    %c0_13 = arith.constant 0 : index
    %36 = vector.load %arg8[%c0_12, %c0_13] : memref<9x128xf32, #tpu.memory_space<vmem>>, vector<9x128xf32>
    %37 = vector.extract_strided_slice %36 {offsets = [0, 0], sizes = [1, 96], strides = [1, 1]} : vector<9x128xf32> to vector<1x96xf32>
    %38 = vector.extract_strided_slice %36 {offsets = [1, 0], sizes = [1, 128], strides = [1, 1]} : vector<9x128xf32> to vector<1x128xf32>
    %39 = vector.extract_strided_slice %36 {offsets = [2, 0], sizes = [1, 32], strides = [1, 1]} : vector<9x128xf32> to vector<1x32xf32>
    %40 = vector.extract_strided_slice %36 {offsets = [2, 32], sizes = [1, 32], strides = [1, 1]} : vector<9x128xf32> to vector<1x32xf32>
    %41 = vector.extract_strided_slice %36 {offsets = [2, 64], sizes = [1, 32], strides = [1, 1]} : vector<9x128xf32> to vector<1x32xf32>
    %42 = vector.extract_strided_slice %36 {offsets = [2, 96], sizes = [1, 32], strides = [1, 1]} : vector<9x128xf32> to vector<1x32xf32>
    %43 = vector.extract_strided_slice %36 {offsets = [3, 0], sizes = [1, 32], strides = [1, 1]} : vector<9x128xf32> to vector<1x32xf32>
    %44 = vector.extract_strided_slice %36 {offsets = [3, 32], sizes = [1, 32], strides = [1, 1]} : vector<9x128xf32> to vector<1x32xf32>
    %cst_14 = arith.constant dense<0.000000e+00> : vector<16xf32>
    %45 = vector.multi_reduction <add>, %17, %cst_14 [1] : vector<16x32xf32> to vector<16xf32>
    %46 = vector.shape_cast %45 : vector<16xf32> to vector<16x1xf32>
    %cst_15 = arith.constant 3.200000e+01 : f32
    %47 = vector.broadcast %cst_15 : f32 to vector<16x1xf32>
    %48 = arith.divf %46, %47 : vector<16x1xf32>
    %49 = vector.broadcast %48 : vector<16x1xf32> to vector<16x32xf32>
    %50 = arith.subf %17, %49 : vector<16x32xf32>
    %51 = arith.mulf %50, %50 : vector<16x32xf32>
    %cst_16 = arith.constant dense<0.000000e+00> : vector<16xf32>
    %52 = vector.multi_reduction <add>, %51, %cst_16 [1] : vector<16x32xf32> to vector<16xf32>
    %53 = vector.shape_cast %52 : vector<16xf32> to vector<16x1xf32>
    %cst_17 = arith.constant 3.200000e+01 : f32
    %54 = vector.broadcast %cst_17 : f32 to vector<16x1xf32>
    %55 = arith.divf %53, %54 : vector<16x1xf32>
    %56 = vector.broadcast %48 : vector<16x1xf32> to vector<16x32xf32>
    %57 = arith.subf %17, %56 : vector<16x32xf32>
    %cst_18 = arith.constant 9.99999974E-6 : f32
    %58 = vector.broadcast %cst_18 : f32 to vector<16x1xf32>
    %59 = arith.addf %55, %58 : vector<16x1xf32>
    %60 = math.rsqrt %59 : vector<16x1xf32>
    %61 = vector.broadcast %60 : vector<16x1xf32> to vector<16x32xf32>
    %62 = arith.mulf %57, %61 : vector<16x32xf32>
    %63 = vector.broadcast %39 : vector<1x32xf32> to vector<16x32xf32>
    %64 = arith.mulf %62, %63 : vector<16x32xf32>
    %65 = vector.broadcast %40 : vector<1x32xf32> to vector<16x32xf32>
    %66 = arith.addf %64, %65 : vector<16x32xf32>
    %67 = arith.truncf %66 : vector<16x32xf32> to vector<16x32xbf16>
    %c0_19 = arith.constant 0 : index
    %c0_20 = arith.constant 0 : index
    %c0_21 = arith.constant 0 : index
    %68 = vector.load %arg4[%c0_19, %c0_20, %c0_21] : memref<2x32x96xbf16, #tpu.memory_space<vmem>>, vector<1x32x96xbf16>
    %69 = vector.shape_cast %68 : vector<1x32x96xbf16> to vector<32x96xbf16>
    %cst_22 = arith.constant dense<0.000000e+00> : vector<16x96xf32>
    %70 = tpu.matmul %67, %69, %cst_22 {dimension_numbers = #tpu.dot_dimension_numbers<[1], [0], [0], [1], [0, 0, 1, 1], [], []>} : vector<16x32xbf16>, vector<32x96xbf16>, vector<16x96xf32> -> vector<16x96xf32>
    %71 = vector.broadcast %37 : vector<1x96xf32> to vector<16x96xf32>
    %72 = arith.addf %70, %71 : vector<16x96xf32>
    %73 = vector.shape_cast %72 : vector<16x96xf32> to vector<2x8x96xf32>
    %74 = vector.extract_strided_slice %73 {offsets = [0, 0, 0], sizes = [2, 8, 32], strides = [1, 1, 1]} : vector<2x8x96xf32> to vector<2x8x32xf32>
    %75 = vector.extract_strided_slice %73 {offsets = [0, 0, 32], sizes = [2, 8, 32], strides = [1, 1, 1]} : vector<2x8x96xf32> to vector<2x8x32xf32>
    %76 = vector.extract_strided_slice %73 {offsets = [0, 0, 64], sizes = [2, 8, 32], strides = [1, 1, 1]} : vector<2x8x96xf32> to vector<2x8x32xf32>
    %77 = vector.extract_strided_slice %74 {offsets = [0, 0, 0], sizes = [2, 8, 16], strides = [1, 1, 1]} : vector<2x8x32xf32> to vector<2x8x16xf32>
    %78 = vector.extract_strided_slice %74 {offsets = [0, 0, 16], sizes = [2, 8, 16], strides = [1, 1, 1]} : vector<2x8x32xf32> to vector<2x8x16xf32>
    %79 = tpu.concatenate %77, %78 in 0 : vector<2x8x16xf32>, vector<2x8x16xf32> -> vector<4x8x16xf32>
    %80 = vector.extract_strided_slice %75 {offsets = [0, 0, 0], sizes = [2, 8, 16], strides = [1, 1, 1]} : vector<2x8x32xf32> to vector<2x8x16xf32>
    %81 = vector.extract_strided_slice %75 {offsets = [0, 0, 16], sizes = [2, 8, 16], strides = [1, 1, 1]} : vector<2x8x32xf32> to vector<2x8x16xf32>
    %82 = tpu.concatenate %80, %81 in 0 : vector<2x8x16xf32>, vector<2x8x16xf32> -> vector<4x8x16xf32>
    %83 = vector.extract_strided_slice %76 {offsets = [0, 0, 0], sizes = [2, 8, 16], strides = [1, 1, 1]} : vector<2x8x32xf32> to vector<2x8x16xf32>
    %84 = vector.extract_strided_slice %76 {offsets = [0, 0, 16], sizes = [2, 8, 16], strides = [1, 1, 1]} : vector<2x8x32xf32> to vector<2x8x16xf32>
    %85 = tpu.concatenate %83, %84 in 0 : vector<2x8x16xf32>, vector<2x8x16xf32> -> vector<4x8x16xf32>
    %86 = arith.truncf %79 : vector<4x8x16xf32> to vector<4x8x16xbf16>
    %87 = arith.truncf %82 : vector<4x8x16xf32> to vector<4x8x16xbf16>
    "tpu.trace_start"() <{level = 10 : i32, message = "gqd,gkd->gqk"}> : () -> ()
    %cst_23 = arith.constant dense<0.000000e+00> : vector<4x8x8xf32>
    %88 = tpu.matmul %86, %87, %cst_23 {dimension_numbers = #tpu.dot_dimension_numbers<[2], [2], [1], [1], [0, 0, 0, 1, 1, 1], [0], [0]>} : vector<4x8x16xbf16>, vector<4x8x16xbf16>, vector<4x8x8xf32> -> vector<4x8x8xf32>
    "tpu.trace_stop"() : () -> ()
    %89 = arith.addf %88, %35 : vector<4x8x8xf32>
    %cst_24 = arith.constant dense<0xFF800000> : vector<4x8xf32>
    %90 = vector.multi_reduction <maximumf>, %89, %cst_24 [2] : vector<4x8x8xf32> to vector<4x8xf32>
    %91 = vector.shape_cast %90 : vector<4x8xf32> to vector<4x8x1xf32>
    %92 = vector.broadcast %91 : vector<4x8x1xf32> to vector<4x8x8xf32>
    %93 = arith.subf %89, %92 : vector<4x8x8xf32>
    %94 = math.exp %93 : vector<4x8x8xf32>
    %cst_25 = arith.constant dense<0.000000e+00> : vector<4x8xf32>
    %95 = vector.multi_reduction <add>, %94, %cst_25 [2] : vector<4x8x8xf32> to vector<4x8xf32>
    %96 = vector.shape_cast %95 : vector<4x8xf32> to vector<4x8x1xf32>
    %97 = arith.truncf %94 : vector<4x8x8xf32> to vector<4x8x8xbf16>
    %98 = arith.truncf %85 : vector<4x8x16xf32> to vector<4x8x16xbf16>
    "tpu.trace_start"() <{level = 10 : i32, message = "gqk,gkd->gqd"}> : () -> ()
    %cst_26 = arith.constant dense<0.000000e+00> : vector<4x8x16xf32>
    %99 = tpu.matmul %97, %98, %cst_26 {dimension_numbers = #tpu.dot_dimension_numbers<[2], [1], [1], [2], [0, 0, 0, 1, 1, 2], [0], [0]>} : vector<4x8x8xbf16>, vector<4x8x16xbf16>, vector<4x8x16xf32> -> vector<4x8x16xf32>
    "tpu.trace_stop"() : () -> ()
    %100 = tpu.reciprocal %96 {approx = true} : vector<4x8x1xf32> -> vector<4x8x1xf32>
    %101 = vector.broadcast %100 : vector<4x8x1xf32> to vector<4x8x16xf32>
    %102 = arith.mulf %99, %101 : vector<4x8x16xf32>
    %103 = vector.extract_strided_slice %102 {offsets = [0, 0, 0], sizes = [2, 8, 16], strides = [1, 1, 1]} : vector<4x8x16xf32> to vector<2x8x16xf32>
    %104 = vector.extract_strided_slice %102 {offsets = [2, 0, 0], sizes = [2, 8, 16], strides = [1, 1, 1]} : vector<4x8x16xf32> to vector<2x8x16xf32>
    %105 = tpu.concatenate %103, %104 in 2 : vector<2x8x16xf32>, vector<2x8x16xf32> -> vector<2x8x32xf32>
    %106 = vector.shape_cast %105 : vector<2x8x32xf32> to vector<16x32xf32>
    %107 = arith.truncf %106 : vector<16x32xf32> to vector<16x32xbf16>
    %c0_27 = arith.constant 0 : index
    %c0_28 = arith.constant 0 : index
    %c0_29 = arith.constant 0 : index
    %108 = vector.load %arg5[%c0_27, %c0_28, %c0_29] : memref<2x32x32xbf16, #tpu.memory_space<vmem>>, vector<1x32x32xbf16>
    %109 = vector.shape_cast %108 : vector<1x32x32xbf16> to vector<32x32xbf16>
    %cst_30 = arith.constant dense<0.000000e+00> : vector<16x32xf32>
    %110 = tpu.matmul %107, %109, %cst_30 {dimension_numbers = #tpu.dot_dimension_numbers<[1], [0], [0], [1], [0, 0, 1, 1], [], []>} : vector<16x32xbf16>, vector<32x32xbf16>, vector<16x32xf32> -> vector<16x32xf32>
    %111 = arith.addf %17, %110 : vector<16x32xf32>
    %112 = vector.broadcast %43 : vector<1x32xf32> to vector<16x32xf32>
    %113 = arith.addf %111, %112 : vector<16x32xf32>
    %cst_31 = arith.constant dense<0.000000e+00> : vector<16xf32>
    %114 = vector.multi_reduction <add>, %113, %cst_31 [1] : vector<16x32xf32> to vector<16xf32>
    %115 = vector.shape_cast %114 : vector<16xf32> to vector<16x1xf32>
    %cst_32 = arith.constant 3.200000e+01 : f32
    %116 = vector.broadcast %cst_32 : f32 to vector<16x1xf32>
    %117 = arith.divf %115, %116 : vector<16x1xf32>
    %118 = vector.broadcast %117 : vector<16x1xf32> to vector<16x32xf32>
    %119 = arith.subf %113, %118 : vector<16x32xf32>
    %120 = arith.mulf %119, %119 : vector<16x32xf32>
    %cst_33 = arith.constant dense<0.000000e+00> : vector<16xf32>
    %121 = vector.multi_reduction <add>, %120, %cst_33 [1] : vector<16x32xf32> to vector<16xf32>
    %122 = vector.shape_cast %121 : vector<16xf32> to vector<16x1xf32>
    %cst_34 = arith.constant 3.200000e+01 : f32
    %123 = vector.broadcast %cst_34 : f32 to vector<16x1xf32>
    %124 = arith.divf %122, %123 : vector<16x1xf32>
    %125 = vector.broadcast %117 : vector<16x1xf32> to vector<16x32xf32>
    %126 = arith.subf %113, %125 : vector<16x32xf32>
    %cst_35 = arith.constant 9.99999974E-6 : f32
    %127 = vector.broadcast %cst_35 : f32 to vector<16x1xf32>
    %128 = arith.addf %124, %127 : vector<16x1xf32>
    %129 = math.rsqrt %128 : vector<16x1xf32>
    %130 = vector.broadcast %129 : vector<16x1xf32> to vector<16x32xf32>
    %131 = arith.mulf %126, %130 : vector<16x32xf32>
    %132 = vector.broadcast %41 : vector<1x32xf32> to vector<16x32xf32>
    %133 = arith.mulf %131, %132 : vector<16x32xf32>
    %134 = vector.broadcast %42 : vector<1x32xf32> to vector<16x32xf32>
    %135 = arith.addf %133, %134 : vector<16x32xf32>
    %136 = arith.truncf %135 : vector<16x32xf32> to vector<16x32xbf16>
    %c0_36 = arith.constant 0 : index
    %c0_37 = arith.constant 0 : index
    %c0_38 = arith.constant 0 : index
    %137 = vector.load %arg6[%c0_36, %c0_37, %c0_38] : memref<2x32x128xbf16, #tpu.memory_space<vmem>>, vector<1x32x128xbf16>
    %138 = vector.shape_cast %137 : vector<1x32x128xbf16> to vector<32x128xbf16>
    %cst_39 = arith.constant dense<0.000000e+00> : vector<16x128xf32>
    %139 = tpu.matmul %136, %138, %cst_39 {dimension_numbers = #tpu.dot_dimension_numbers<[1], [0], [0], [1], [0, 0, 1, 1], [], []>} : vector<16x32xbf16>, vector<32x128xbf16>, vector<16x128xf32> -> vector<16x128xf32>
    %140 = vector.broadcast %38 : vector<1x128xf32> to vector<16x128xf32>
    %141 = arith.addf %139, %140 : vector<16x128xf32>
    %cst_40 = arith.constant 5.000000e-01 : f32
    %142 = vector.broadcast %cst_40 : f32 to vector<16x128xf32>
    %143 = arith.mulf %142, %141 : vector<16x128xf32>
    %cst_41 = arith.constant 4.471500e-02 : f32
    %144 = vector.broadcast %cst_41 : f32 to vector<16x128xf32>
    %145 = arith.mulf %144, %141 : vector<16x128xf32>
    %146 = arith.mulf %145, %141 : vector<16x128xf32>
    %147 = arith.mulf %146, %141 : vector<16x128xf32>
    %148 = arith.addf %141, %147 : vector<16x128xf32>
    %cst_42 = arith.constant 0.797884583 : f32
    %149 = vector.broadcast %cst_42 : f32 to vector<16x128xf32>
    %150 = arith.mulf %149, %148 : vector<16x128xf32>
    %151 = math.tanh %150 : vector<16x128xf32>
    %cst_43 = arith.constant 1.000000e+00 : f32
    %152 = vector.broadcast %cst_43 : f32 to vector<16x128xf32>
    %153 = arith.addf %152, %151 : vector<16x128xf32>
    %154 = arith.mulf %143, %153 : vector<16x128xf32>
    %155 = arith.truncf %154 : vector<16x128xf32> to vector<16x128xbf16>
    %c0_44 = arith.constant 0 : index
    %c0_45 = arith.constant 0 : index
    %c0_46 = arith.constant 0 : index
    %156 = vector.load %arg7[%c0_44, %c0_45, %c0_46] : memref<2x128x32xbf16, #tpu.memory_space<vmem>>, vector<1x128x32xbf16>
    %157 = vector.shape_cast %156 : vector<1x128x32xbf16> to vector<128x32xbf16>
    %cst_47 = arith.constant dense<0.000000e+00> : vector<16x32xf32>
    %158 = tpu.matmul %155, %157, %cst_47 {dimension_numbers = #tpu.dot_dimension_numbers<[1], [0], [0], [1], [0, 0, 1, 1], [], []>} : vector<16x128xbf16>, vector<128x32xbf16>, vector<16x32xf32> -> vector<16x32xf32>
    %159 = arith.addf %113, %158 : vector<16x32xf32>
    %160 = vector.broadcast %44 : vector<1x32xf32> to vector<16x32xf32>
    %161 = arith.addf %159, %160 : vector<16x32xf32>
    %162 = vector.extract_strided_slice %36 {offsets = [4, 0], sizes = [1, 96], strides = [1, 1]} : vector<9x128xf32> to vector<1x96xf32>
    %163 = vector.extract_strided_slice %36 {offsets = [5, 0], sizes = [1, 128], strides = [1, 1]} : vector<9x128xf32> to vector<1x128xf32>
    %164 = vector.extract_strided_slice %36 {offsets = [6, 0], sizes = [1, 32], strides = [1, 1]} : vector<9x128xf32> to vector<1x32xf32>
    %165 = vector.extract_strided_slice %36 {offsets = [6, 32], sizes = [1, 32], strides = [1, 1]} : vector<9x128xf32> to vector<1x32xf32>
    %166 = vector.extract_strided_slice %36 {offsets = [6, 64], sizes = [1, 32], strides = [1, 1]} : vector<9x128xf32> to vector<1x32xf32>
    %167 = vector.extract_strided_slice %36 {offsets = [6, 96], sizes = [1, 32], strides = [1, 1]} : vector<9x128xf32> to vector<1x32xf32>
    %168 = vector.extract_strided_slice %36 {offsets = [7, 0], sizes = [1, 32], strides = [1, 1]} : vector<9x128xf32> to vector<1x32xf32>
    %169 = vector.extract_strided_slice %36 {offsets = [7, 32], sizes = [1, 32], strides = [1, 1]} : vector<9x128xf32> to vector<1x32xf32>
    %cst_48 = arith.constant dense<0.000000e+00> : vector<16xf32>
    %170 = vector.multi_reduction <add>, %161, %cst_48 [1] : vector<16x32xf32> to vector<16xf32>
    %171 = vector.shape_cast %170 : vector<16xf32> to vector<16x1xf32>
    %cst_49 = arith.constant 3.200000e+01 : f32
    %172 = vector.broadcast %cst_49 : f32 to vector<16x1xf32>
    %173 = arith.divf %171, %172 : vector<16x1xf32>
    %174 = vector.broadcast %173 : vector<16x1xf32> to vector<16x32xf32>
    %175 = arith.subf %161, %174 : vector<16x32xf32>
    %176 = arith.mulf %175, %175 : vector<16x32xf32>
    %cst_50 = arith.constant dense<0.000000e+00> : vector<16xf32>
    %177 = vector.multi_reduction <add>, %176, %cst_50 [1] : vector<16x32xf32> to vector<16xf32>
    %178 = vector.shape_cast %177 : vector<16xf32> to vector<16x1xf32>
    %cst_51 = arith.constant 3.200000e+01 : f32
    %179 = vector.broadcast %cst_51 : f32 to vector<16x1xf32>
    %180 = arith.divf %178, %179 : vector<16x1xf32>
    %181 = vector.broadcast %173 : vector<16x1xf32> to vector<16x32xf32>
    %182 = arith.subf %161, %181 : vector<16x32xf32>
    %cst_52 = arith.constant 9.99999974E-6 : f32
    %183 = vector.broadcast %cst_52 : f32 to vector<16x1xf32>
    %184 = arith.addf %180, %183 : vector<16x1xf32>
    %185 = math.rsqrt %184 : vector<16x1xf32>
    %186 = vector.broadcast %185 : vector<16x1xf32> to vector<16x32xf32>
    %187 = arith.mulf %182, %186 : vector<16x32xf32>
    %188 = vector.broadcast %164 : vector<1x32xf32> to vector<16x32xf32>
    %189 = arith.mulf %187, %188 : vector<16x32xf32>
    %190 = vector.broadcast %165 : vector<1x32xf32> to vector<16x32xf32>
    %191 = arith.addf %189, %190 : vector<16x32xf32>
    %192 = arith.truncf %191 : vector<16x32xf32> to vector<16x32xbf16>
    %c1 = arith.constant 1 : index
    %c0_53 = arith.constant 0 : index
    %c0_54 = arith.constant 0 : index
    %193 = vector.load %arg4[%c1, %c0_53, %c0_54] : memref<2x32x96xbf16, #tpu.memory_space<vmem>>, vector<1x32x96xbf16>
    %194 = vector.shape_cast %193 : vector<1x32x96xbf16> to vector<32x96xbf16>
    %cst_55 = arith.constant dense<0.000000e+00> : vector<16x96xf32>
    %195 = tpu.matmul %192, %194, %cst_55 {dimension_numbers = #tpu.dot_dimension_numbers<[1], [0], [0], [1], [0, 0, 1, 1], [], []>} : vector<16x32xbf16>, vector<32x96xbf16>, vector<16x96xf32> -> vector<16x96xf32>
    %196 = vector.broadcast %162 : vector<1x96xf32> to vector<16x96xf32>
    %197 = arith.addf %195, %196 : vector<16x96xf32>
    %198 = vector.shape_cast %197 : vector<16x96xf32> to vector<2x8x96xf32>
    %199 = vector.extract_strided_slice %198 {offsets = [0, 0, 0], sizes = [2, 8, 32], strides = [1, 1, 1]} : vector<2x8x96xf32> to vector<2x8x32xf32>
    %200 = vector.extract_strided_slice %198 {offsets = [0, 0, 32], sizes = [2, 8, 32], strides = [1, 1, 1]} : vector<2x8x96xf32> to vector<2x8x32xf32>
    %201 = vector.extract_strided_slice %198 {offsets = [0, 0, 64], sizes = [2, 8, 32], strides = [1, 1, 1]} : vector<2x8x96xf32> to vector<2x8x32xf32>
    %202 = vector.extract_strided_slice %199 {offsets = [0, 0, 0], sizes = [2, 8, 16], strides = [1, 1, 1]} : vector<2x8x32xf32> to vector<2x8x16xf32>
    %203 = vector.extract_strided_slice %199 {offsets = [0, 0, 16], sizes = [2, 8, 16], strides = [1, 1, 1]} : vector<2x8x32xf32> to vector<2x8x16xf32>
    %204 = tpu.concatenate %202, %203 in 0 : vector<2x8x16xf32>, vector<2x8x16xf32> -> vector<4x8x16xf32>
    %205 = vector.extract_strided_slice %200 {offsets = [0, 0, 0], sizes = [2, 8, 16], strides = [1, 1, 1]} : vector<2x8x32xf32> to vector<2x8x16xf32>
    %206 = vector.extract_strided_slice %200 {offsets = [0, 0, 16], sizes = [2, 8, 16], strides = [1, 1, 1]} : vector<2x8x32xf32> to vector<2x8x16xf32>
    %207 = tpu.concatenate %205, %206 in 0 : vector<2x8x16xf32>, vector<2x8x16xf32> -> vector<4x8x16xf32>
    %208 = vector.extract_strided_slice %201 {offsets = [0, 0, 0], sizes = [2, 8, 16], strides = [1, 1, 1]} : vector<2x8x32xf32> to vector<2x8x16xf32>
    %209 = vector.extract_strided_slice %201 {offsets = [0, 0, 16], sizes = [2, 8, 16], strides = [1, 1, 1]} : vector<2x8x32xf32> to vector<2x8x16xf32>
    %210 = tpu.concatenate %208, %209 in 0 : vector<2x8x16xf32>, vector<2x8x16xf32> -> vector<4x8x16xf32>
    %211 = arith.truncf %204 : vector<4x8x16xf32> to vector<4x8x16xbf16>
    %212 = arith.truncf %207 : vector<4x8x16xf32> to vector<4x8x16xbf16>
    "tpu.trace_start"() <{level = 10 : i32, message = "gqd,gkd->gqk"}> : () -> ()
    %cst_56 = arith.constant dense<0.000000e+00> : vector<4x8x8xf32>
    %213 = tpu.matmul %211, %212, %cst_56 {dimension_numbers = #tpu.dot_dimension_numbers<[2], [2], [1], [1], [0, 0, 0, 1, 1, 1], [0], [0]>} : vector<4x8x16xbf16>, vector<4x8x16xbf16>, vector<4x8x8xf32> -> vector<4x8x8xf32>
    "tpu.trace_stop"() : () -> ()
    %214 = arith.addf %213, %35 : vector<4x8x8xf32>
    %cst_57 = arith.constant dense<0xFF800000> : vector<4x8xf32>
    %215 = vector.multi_reduction <maximumf>, %214, %cst_57 [2] : vector<4x8x8xf32> to vector<4x8xf32>
    %216 = vector.shape_cast %215 : vector<4x8xf32> to vector<4x8x1xf32>
    %217 = vector.broadcast %216 : vector<4x8x1xf32> to vector<4x8x8xf32>
    %218 = arith.subf %214, %217 : vector<4x8x8xf32>
    %219 = math.exp %218 : vector<4x8x8xf32>
    %cst_58 = arith.constant dense<0.000000e+00> : vector<4x8xf32>
    %220 = vector.multi_reduction <add>, %219, %cst_58 [2] : vector<4x8x8xf32> to vector<4x8xf32>
    %221 = vector.shape_cast %220 : vector<4x8xf32> to vector<4x8x1xf32>
    %222 = arith.truncf %219 : vector<4x8x8xf32> to vector<4x8x8xbf16>
    %223 = arith.truncf %210 : vector<4x8x16xf32> to vector<4x8x16xbf16>
    "tpu.trace_start"() <{level = 10 : i32, message = "gqk,gkd->gqd"}> : () -> ()
    %cst_59 = arith.constant dense<0.000000e+00> : vector<4x8x16xf32>
    %224 = tpu.matmul %222, %223, %cst_59 {dimension_numbers = #tpu.dot_dimension_numbers<[2], [1], [1], [2], [0, 0, 0, 1, 1, 2], [0], [0]>} : vector<4x8x8xbf16>, vector<4x8x16xbf16>, vector<4x8x16xf32> -> vector<4x8x16xf32>
    "tpu.trace_stop"() : () -> ()
    %225 = tpu.reciprocal %221 {approx = true} : vector<4x8x1xf32> -> vector<4x8x1xf32>
    %226 = vector.broadcast %225 : vector<4x8x1xf32> to vector<4x8x16xf32>
    %227 = arith.mulf %224, %226 : vector<4x8x16xf32>
    %228 = vector.extract_strided_slice %227 {offsets = [0, 0, 0], sizes = [2, 8, 16], strides = [1, 1, 1]} : vector<4x8x16xf32> to vector<2x8x16xf32>
    %229 = vector.extract_strided_slice %227 {offsets = [2, 0, 0], sizes = [2, 8, 16], strides = [1, 1, 1]} : vector<4x8x16xf32> to vector<2x8x16xf32>
    %230 = tpu.concatenate %228, %229 in 2 : vector<2x8x16xf32>, vector<2x8x16xf32> -> vector<2x8x32xf32>
    %231 = vector.shape_cast %230 : vector<2x8x32xf32> to vector<16x32xf32>
    %232 = arith.truncf %231 : vector<16x32xf32> to vector<16x32xbf16>
    %c1_60 = arith.constant 1 : index
    %c0_61 = arith.constant 0 : index
    %c0_62 = arith.constant 0 : index
    %233 = vector.load %arg5[%c1_60, %c0_61, %c0_62] : memref<2x32x32xbf16, #tpu.memory_space<vmem>>, vector<1x32x32xbf16>
    %234 = vector.shape_cast %233 : vector<1x32x32xbf16> to vector<32x32xbf16>
    %cst_63 = arith.constant dense<0.000000e+00> : vector<16x32xf32>
    %235 = tpu.matmul %232, %234, %cst_63 {dimension_numbers = #tpu.dot_dimension_numbers<[1], [0], [0], [1], [0, 0, 1, 1], [], []>} : vector<16x32xbf16>, vector<32x32xbf16>, vector<16x32xf32> -> vector<16x32xf32>
    %236 = arith.addf %161, %235 : vector<16x32xf32>
    %237 = vector.broadcast %168 : vector<1x32xf32> to vector<16x32xf32>
    %238 = arith.addf %236, %237 : vector<16x32xf32>
    %cst_64 = arith.constant dense<0.000000e+00> : vector<16xf32>
    %239 = vector.multi_reduction <add>, %238, %cst_64 [1] : vector<16x32xf32> to vector<16xf32>
    %240 = vector.shape_cast %239 : vector<16xf32> to vector<16x1xf32>
    %cst_65 = arith.constant 3.200000e+01 : f32
    %241 = vector.broadcast %cst_65 : f32 to vector<16x1xf32>
    %242 = arith.divf %240, %241 : vector<16x1xf32>
    %243 = vector.broadcast %242 : vector<16x1xf32> to vector<16x32xf32>
    %244 = arith.subf %238, %243 : vector<16x32xf32>
    %245 = arith.mulf %244, %244 : vector<16x32xf32>
    %cst_66 = arith.constant dense<0.000000e+00> : vector<16xf32>
    %246 = vector.multi_reduction <add>, %245, %cst_66 [1] : vector<16x32xf32> to vector<16xf32>
    %247 = vector.shape_cast %246 : vector<16xf32> to vector<16x1xf32>
    %cst_67 = arith.constant 3.200000e+01 : f32
    %248 = vector.broadcast %cst_67 : f32 to vector<16x1xf32>
    %249 = arith.divf %247, %248 : vector<16x1xf32>
    %250 = vector.broadcast %242 : vector<16x1xf32> to vector<16x32xf32>
    %251 = arith.subf %238, %250 : vector<16x32xf32>
    %cst_68 = arith.constant 9.99999974E-6 : f32
    %252 = vector.broadcast %cst_68 : f32 to vector<16x1xf32>
    %253 = arith.addf %249, %252 : vector<16x1xf32>
    %254 = math.rsqrt %253 : vector<16x1xf32>
    %255 = vector.broadcast %254 : vector<16x1xf32> to vector<16x32xf32>
    %256 = arith.mulf %251, %255 : vector<16x32xf32>
    %257 = vector.broadcast %166 : vector<1x32xf32> to vector<16x32xf32>
    %258 = arith.mulf %256, %257 : vector<16x32xf32>
    %259 = vector.broadcast %167 : vector<1x32xf32> to vector<16x32xf32>
    %260 = arith.addf %258, %259 : vector<16x32xf32>
    %261 = arith.truncf %260 : vector<16x32xf32> to vector<16x32xbf16>
    %c1_69 = arith.constant 1 : index
    %c0_70 = arith.constant 0 : index
    %c0_71 = arith.constant 0 : index
    %262 = vector.load %arg6[%c1_69, %c0_70, %c0_71] : memref<2x32x128xbf16, #tpu.memory_space<vmem>>, vector<1x32x128xbf16>
    %263 = vector.shape_cast %262 : vector<1x32x128xbf16> to vector<32x128xbf16>
    %cst_72 = arith.constant dense<0.000000e+00> : vector<16x128xf32>
    %264 = tpu.matmul %261, %263, %cst_72 {dimension_numbers = #tpu.dot_dimension_numbers<[1], [0], [0], [1], [0, 0, 1, 1], [], []>} : vector<16x32xbf16>, vector<32x128xbf16>, vector<16x128xf32> -> vector<16x128xf32>
    %265 = vector.broadcast %163 : vector<1x128xf32> to vector<16x128xf32>
    %266 = arith.addf %264, %265 : vector<16x128xf32>
    %cst_73 = arith.constant 5.000000e-01 : f32
    %267 = vector.broadcast %cst_73 : f32 to vector<16x128xf32>
    %268 = arith.mulf %267, %266 : vector<16x128xf32>
    %cst_74 = arith.constant 4.471500e-02 : f32
    %269 = vector.broadcast %cst_74 : f32 to vector<16x128xf32>
    %270 = arith.mulf %269, %266 : vector<16x128xf32>
    %271 = arith.mulf %270, %266 : vector<16x128xf32>
    %272 = arith.mulf %271, %266 : vector<16x128xf32>
    %273 = arith.addf %266, %272 : vector<16x128xf32>
    %cst_75 = arith.constant 0.797884583 : f32
    %274 = vector.broadcast %cst_75 : f32 to vector<16x128xf32>
    %275 = arith.mulf %274, %273 : vector<16x128xf32>
    %276 = math.tanh %275 : vector<16x128xf32>
    %cst_76 = arith.constant 1.000000e+00 : f32
    %277 = vector.broadcast %cst_76 : f32 to vector<16x128xf32>
    %278 = arith.addf %277, %276 : vector<16x128xf32>
    %279 = arith.mulf %268, %278 : vector<16x128xf32>
    %280 = arith.truncf %279 : vector<16x128xf32> to vector<16x128xbf16>
    %c1_77 = arith.constant 1 : index
    %c0_78 = arith.constant 0 : index
    %c0_79 = arith.constant 0 : index
    %281 = vector.load %arg7[%c1_77, %c0_78, %c0_79] : memref<2x128x32xbf16, #tpu.memory_space<vmem>>, vector<1x128x32xbf16>
    %282 = vector.shape_cast %281 : vector<1x128x32xbf16> to vector<128x32xbf16>
    %cst_80 = arith.constant dense<0.000000e+00> : vector<16x32xf32>
    %283 = tpu.matmul %280, %282, %cst_80 {dimension_numbers = #tpu.dot_dimension_numbers<[1], [0], [0], [1], [0, 0, 1, 1], [], []>} : vector<16x128xbf16>, vector<128x32xbf16>, vector<16x32xf32> -> vector<16x32xf32>
    %284 = arith.addf %238, %283 : vector<16x32xf32>
    %285 = vector.broadcast %169 : vector<1x32xf32> to vector<16x32xf32>
    %286 = arith.addf %284, %285 : vector<16x32xf32>
    %287 = vector.extract_strided_slice %36 {offsets = [8, 0], sizes = [1, 32], strides = [1, 1]} : vector<9x128xf32> to vector<1x32xf32>
    %288 = vector.extract_strided_slice %36 {offsets = [8, 32], sizes = [1, 32], strides = [1, 1]} : vector<9x128xf32> to vector<1x32xf32>
    %cst_81 = arith.constant dense<0.000000e+00> : vector<16xf32>
    %289 = vector.multi_reduction <add>, %286, %cst_81 [1] : vector<16x32xf32> to vector<16xf32>
    %290 = vector.shape_cast %289 : vector<16xf32> to vector<16x1xf32>
    %cst_82 = arith.constant 3.200000e+01 : f32
    %291 = vector.broadcast %cst_82 : f32 to vector<16x1xf32>
    %292 = arith.divf %290, %291 : vector<16x1xf32>
    %293 = vector.broadcast %292 : vector<16x1xf32> to vector<16x32xf32>
    %294 = arith.subf %286, %293 : vector<16x32xf32>
    %295 = arith.mulf %294, %294 : vector<16x32xf32>
    %cst_83 = arith.constant dense<0.000000e+00> : vector<16xf32>
    %296 = vector.multi_reduction <add>, %295, %cst_83 [1] : vector<16x32xf32> to vector<16xf32>
    %297 = vector.shape_cast %296 : vector<16xf32> to vector<16x1xf32>
    %cst_84 = arith.constant 3.200000e+01 : f32
    %298 = vector.broadcast %cst_84 : f32 to vector<16x1xf32>
    %299 = arith.divf %297, %298 : vector<16x1xf32>
    %300 = vector.broadcast %292 : vector<16x1xf32> to vector<16x32xf32>
    %301 = arith.subf %286, %300 : vector<16x32xf32>
    %cst_85 = arith.constant 9.99999974E-6 : f32
    %302 = vector.broadcast %cst_85 : f32 to vector<16x1xf32>
    %303 = arith.addf %299, %302 : vector<16x1xf32>
    %304 = math.rsqrt %303 : vector<16x1xf32>
    %305 = vector.broadcast %304 : vector<16x1xf32> to vector<16x32xf32>
    %306 = arith.mulf %301, %305 : vector<16x32xf32>
    %307 = vector.broadcast %287 : vector<1x32xf32> to vector<16x32xf32>
    %308 = arith.mulf %306, %307 : vector<16x32xf32>
    %309 = vector.broadcast %288 : vector<1x32xf32> to vector<16x32xf32>
    %310 = arith.addf %308, %309 : vector<16x32xf32>
    %311 = arith.truncf %310 : vector<16x32xf32> to vector<16x32xbf16>
    %c0_86 = arith.constant 0 : index
    %c0_87 = arith.constant 0 : index
    %312 = vector.load %arg9[%c0_86, %c0_87] : memref<32x128xbf16, #tpu.memory_space<vmem>>, vector<32x128xbf16>
    %cst_88 = arith.constant dense<0.000000e+00> : vector<16x128xf32>
    %313 = tpu.matmul %311, %312, %cst_88 {dimension_numbers = #tpu.dot_dimension_numbers<[1], [0], [0], [1], [0, 0, 1, 1], [], []>} : vector<16x32xbf16>, vector<32x128xbf16>, vector<16x128xf32> -> vector<16x128xf32>
    %c0_89 = arith.constant 0 : index
    %c0_90 = arith.constant 0 : index
    %314 = vector.load %arg10[%c0_89, %c0_90] : memref<16x128xf32, #tpu.memory_space<vmem>>, vector<16x128xf32>
    tpu.vector_store %arg10[%c0_89, %c0_90], %313 {strides = array<i32>} : memref<16x128xf32, #tpu.memory_space<vmem>>, vector<16x128xf32>,
    return
  }
}

</mosaic_0001>

<llo_original>
// kernel: gpt_lm_forward.1
$region0: #{gpt_lm_forward.1}
  #allocation0 [shape = 'u32[]', space=smem, size = 0x4, offset = 0x4, fixed_abs, tag = 'smem constant byte address 0x4 - core index']
  #allocation1 [shape = 'u32[144,128]{1,0:T(1,128)}', space=vmem, size = 0x12000, scoped, tag = 'internal scratch']
  %s0 = inlined_call_operand.vmem [shape: s32[2,8], index: 0, kind: input, shape index: {}]
  %s1 = inlined_call_operand.vmem [shape: s32[2,8], index: 1, kind: input, shape index: {}]
  %s2 = inlined_call_operand.vmem [shape: bf16[128,32], index: 2, kind: input, shape index: {}]
  %s3 = inlined_call_operand.vmem [shape: f32[16,32], index: 3, kind: input, shape index: {}]
  %s4 = inlined_call_operand.vmem [shape: bf16[2,32,96], index: 4, kind: input, shape index: {}]
  %s5 = inlined_call_operand.vmem [shape: bf16[2,32,32], index: 5, kind: input, shape index: {}]
  %s6 = inlined_call_operand.vmem [shape: bf16[2,32,128], index: 6, kind: input, shape index: {}]
  %s7 = inlined_call_operand.vmem [shape: bf16[2,128,32], index: 7, kind: input, shape index: {}]
  %s8 = inlined_call_operand.vmem [shape: f32[9,128], index: 8, kind: input, shape index: {}]
  %s9 = inlined_call_operand.vmem [shape: bf16[32,128], index: 9, kind: input, shape index: {}]
  %s10 = inlined_call_operand.hbm [shape: f32[16,128], index: 10, kind: output, shape index: {}]
  %s11 = sld [smem:[#allocation0]]
  $region50: #{gpt_lm_forward.1} parent=0
    _
  %s13 = ssub.s32 1, %s11
  %s14 = scalar_select 0, %s13, %s11
  $region1: #{gpt_lm_forward.1} parent=0
    #allocation2 [shape = 'u8[8192]{0}', space=vmem, size = 0x2000, scoped, tag = 'output window, operand 0, single buffered']
    #allocation3 [shape = 's32[1]{0}', space=sflag, size = 0x4, scoped, tag = 'scoped memory for gpt_lm_forward.1']
    %15 = vsyncpa [#allocation3], 0
    // Predicated region
    $region2: #{gpt_lm_forward.1} parent=1 // pred_check
      _
    $region3: #{gpt_lm_forward.1} parent=1 // pred_check_branch
      %17 = sbr.rel (0) target = $region5
    $region4: #{gpt_lm_forward.1} parent=1 // pred_region
      _
    $region5: #{gpt_lm_forward.1} parent=1 // pred_fallthru
      _
    // Predicated region
    $region6: #{gpt_lm_forward.1} parent=1 // pred_check
      _
    $region7: #{gpt_lm_forward.1} parent=1 // pred_check_branch
      %19 = sbr.rel (0) target = $region9
    $region8: #{gpt_lm_forward.1} parent=1 // pred_region
      _
    $region9: #{gpt_lm_forward.1} parent=1 // pred_fallthru
      _
    // Predicated region
    $region10: #{gpt_lm_forward.1} parent=1 // pred_check
      _
    $region11: #{gpt_lm_forward.1} parent=1 // pred_check_branch
      %21 = sbr.rel (0) target = $region13
    $region12: #{gpt_lm_forward.1} parent=1 // pred_region
      _
    $region13: #{gpt_lm_forward.1} parent=1 // pred_fallthru
      _
    // Predicated region
    $region14: #{gpt_lm_forward.1} parent=1 // pred_check
      _
    $region15: #{gpt_lm_forward.1} parent=1 // pred_check_branch
      %23 = sbr.rel (0) target = $region17
    $region16: #{gpt_lm_forward.1} parent=1 // pred_region
      _
    $region17: #{gpt_lm_forward.1} parent=1 // pred_fallthru
      _
    // Predicated region
    $region18: #{gpt_lm_forward.1} parent=1 // pred_check
      _
    $region19: #{gpt_lm_forward.1} parent=1 // pred_check_branch
      %25 = sbr.rel (0) target = $region21
    $region20: #{gpt_lm_forward.1} parent=1 // pred_region
      _
    $region21: #{gpt_lm_forward.1} parent=1 // pred_fallthru
      _
    // Predicated region
    $region22: #{gpt_lm_forward.1} parent=1 // pred_check
      _
    $region23: #{gpt_lm_forward.1} parent=1 // pred_check_branch
      %27 = sbr.rel (0) target = $region25
    $region24: #{gpt_lm_forward.1} parent=1 // pred_region
      _
    $region25: #{gpt_lm_forward.1} parent=1 // pred_fallthru
      _
    // Predicated region
    $region26: #{gpt_lm_forward.1} parent=1 // pred_check
      _
    $region27: #{gpt_lm_forward.1} parent=1 // pred_check_branch
      %29 = sbr.rel (0) target = $region29
    $region28: #{gpt_lm_forward.1} parent=1 // pred_region
      _
    $region29: #{gpt_lm_forward.1} parent=1 // pred_fallthru
      _
    // Predicated region
    $region30: #{gpt_lm_forward.1} parent=1 // pred_check
      _
    $region31: #{gpt_lm_forward.1} parent=1 // pred_check_branch
      %31 = sbr.rel (0) target = $region33
    $region32: #{gpt_lm_forward.1} parent=1 // pred_region
      _
    $region33: #{gpt_lm_forward.1} parent=1 // pred_fallthru
      _
    // Predicated region
    $region34: #{gpt_lm_forward.1} parent=1 // pred_check
      _
    $region35: #{gpt_lm_forward.1} parent=1 // pred_check_branch
      %33 = sbr.rel (0) target = $region37
    $region36: #{gpt_lm_forward.1} parent=1 // pred_region
      _
    $region37: #{gpt_lm_forward.1} parent=1 // pred_fallthru
      _
    // Predicated region
    $region38: #{gpt_lm_forward.1} parent=1 // pred_check
      _
    $region39: #{gpt_lm_forward.1} parent=1 // pred_check_branch
      %35 = sbr.rel (0) target = $region41
    $region40: #{gpt_lm_forward.1} parent=1 // pred_region
      _
    $region41: #{gpt_lm_forward.1} parent=1 // pred_fallthru
      _
    %v37 = vld [vmem:[%s0] sm:$0x3]
    %v38 = vlaneseq
    %v39 = vand.u32 %v38, 127
    %v40 = vlaneseq
    %v41 = vshrl.u32 %v40, 7
    %v42 = vsub.s32 0, %v41
    %v43 = vrot.slane %v37, %v42
    %45 = vbcast.lane.b32.xlu0 %v43, 256
    %v46 = vpop.permute.xlu0 %45
    %v47 = vlaneseq
    %v48 = vshrl.u32 %v47, 7
    %v49 = vsub.s32 1, %v48
    %v50 = vrot.slane %v37, %v49
    %52 = vbcast.lane.b32.xlu0 %v50, 256
    %v53 = vpop.permute.xlu0 %52
    %vm54 = vcmp.eq.s32.totalorder %v46, %v39
    %vm55 = vcmp.eq.s32.totalorder %v53, %v39
    %v56 = vsel %vm54, 1.0, 0.0
    %v57 = vsel %vm55, 1.0, 0.0
    %v58 = vpack.c.bf16 %v57, %v56
    %v59 = vld [vmem:[%s2] sm:$0xf]
    %v60 = vld [vmem:[%s2 + $0x4] sm:$0xf]
    %v61 = vld [vmem:[%s2 + $0x8] sm:$0xf]
    %v62 = vld [vmem:[%s2 + $0xc] sm:$0xf]
    %v63 = vld [vmem:[%s2 + $0x10] sm:$0xf]
    %v64 = vld [vmem:[%s2 + $0x14] sm:$0xf]
    %v65 = vld [vmem:[%s2 + $0x18] sm:$0xf]
    %v66 = vld [vmem:[%s2 + $0x1c] sm:$0xf]
    %v67 = vld [vmem:[%s2 + $0x20] sm:$0xf]
    %v68 = vld [vmem:[%s2 + $0x24] sm:$0xf]
    %v69 = vld [vmem:[%s2 + $0x28] sm:$0xf]
    %v70 = vld [vmem:[%s2 + $0x2c] sm:$0xf]
    %v71 = vld [vmem:[%s2 + $0x30] sm:$0xf]
    %v72 = vld [vmem:[%s2 + $0x34] sm:$0xf]
    %v73 = vld [vmem:[%s2 + $0x38] sm:$0xf]
    %v74 = vld [vmem:[%s2 + $0x3c] sm:$0xf]
    %v91 = vunpack.c.l.b16 %v59
    %v92 = vunpack.c.l.b16 %v60
    %v93 = vunpack.c.l.b16 %v61
    %v94 = vunpack.c.l.b16 %v62
    %v95 = vunpack.c.l.b16 %v63
    %v96 = vunpack.c.l.b16 %v64
    %v97 = vunpack.c.l.b16 %v65
    %v98 = vunpack.c.l.b16 %v66
    %v99 = vunpack.c.l.b16 %v67
    %v100 = vunpack.c.l.b16 %v68
    %v101 = vunpack.c.l.b16 %v69
    %v102 = vunpack.c.l.b16 %v70
    %v103 = vunpack.c.l.b16 %v71
    %v104 = vunpack.c.l.b16 %v72
    %v105 = vunpack.c.l.b16 %v73
    %v106 = vunpack.c.l.b16 %v74
    %v107 = vpack.c.b16 %v92, %v91
    %v108 = vpack.c.b16 %v94, %v93
    %v109 = vpack.c.b16 %v96, %v95
    %v110 = vpack.c.b16 %v98, %v97
    %v111 = vpack.c.b16 %v100, %v99
    %v112 = vpack.c.b16 %v102, %v101
    %v113 = vpack.c.b16 %v104, %v103
    %v114 = vpack.c.b16 %v106, %v105
    %123 = vmatprep.subr.bf16.mxu0 0
    %124 = vmatpush1.bf16.msra.mxu0 %v114
    %125 = vmatprep.subr.bf16.mxu0 0
    %126 = vmatpush1.bf16.msra.mxu0 %v113
    %127 = vmatprep.subr.bf16.mxu0 0
    %128 = vmatpush1.bf16.msra.mxu0 %v112
    %129 = vmatprep.subr.bf16.mxu0 0
    %130 = vmatpush1.bf16.msra.mxu0 %v111
    %131 = vmatprep.subr.bf16.mxu0 0
    %132 = vmatpush1.bf16.msra.mxu0 %v110
    %133 = vmatprep.subr.bf16.mxu0 0
    %134 = vmatpush1.bf16.msra.mxu0 %v109
    %135 = vmatprep.subr.bf16.mxu0 0
    %136 = vmatpush1.bf16.msra.mxu0 %v108
    %137 = vmatprep.subr.bf16.mxu0 0
    %138 = vmatpush1.bf16.msra.mxu0 %v107
    %139 = vmatprep.subr.bf16.mxu0 0
    %140 = vmatpush2.bf16.msra.mxu0 0
    %141 = vmatprep.subr.bf16.mxu0 0
    %142 = vmatpush2.bf16.msra.mxu0 0
    %143 = vmatprep.subr.bf16.mxu0 0
    %144 = vmatpush2.bf16.msra.mxu0 0
    %145 = vmatprep.subr.bf16.mxu0 0
    %146 = vmatpush2.bf16.msra.mxu0 0
    %147 = vmatprep.subr.bf16.mxu0 0
    %148 = vmatpush2.bf16.msra.mxu0 0
    %149 = vmatprep.subr.bf16.mxu0 0
    %150 = vmatpush2.bf16.msra.mxu0 0
    %151 = vmatprep.subr.bf16.mxu0 0
    %152 = vmatpush2.bf16.msra.mxu0 0
    %153 = vmatprep.subr.bf16.mxu0 0
    %154 = vmatpush2.bf16.msra.mxu0 0
    %155 = vmatprep.mubr.bf16.mxu0 0
    %156 = vmatmul.mubr.bf16.gmra.mxu0 %v58
    %v157 = vpop.f32.mrf.mxu0
    %v158 = vadd.f32 0.0, %v157
    %v159 = vpop.f32.mrf.mxu0
    %v160 = vpop.f32.mrf.mxu0
    %v161 = vadd.f32 0.0, %v160
    %v162 = vpop.f32.mrf.mxu0
    %163 = vdwg.mxu0
    %v164 = vld [vmem:[%s3] sm:$0xff]
    %v165 = vadd.f32 %v158, %v164
    %v166 = vadd.f32 %v161, %v164
    %v167 = vld [vmem:[%s1] sm:$0x3]
    %vm168 = vcmp.gt.s32.totalorder %v167, 0
    %v169 = vsel %vm168, 0.0, -1e+09
    %v170 = vlaneseq
    %v171 = vshrl.u32 %v170, 7
    %vm172 = vcmp.le.s32.totalorder %v39, %v171
    %v175 = vunpack.c.l.s4 1966171168
    %v176 = vunpack.c.0.s8 %v175
    %v177 = vlaneseq
    %v178 = vshrl.u32 %v177, 7
    %v179 = vsub.s32 %v176, %v178
    %v180 = vrot.slane %v169, %v179
    %v181 = vcombine.high %v180, %v180
    %v183 = vunpack.c.l.s4 1966171168
    %v184 = vunpack.c.0.s8 %v183
    %v185 = vlaneseq
    %v186 = vshrl.u32 %v185, 7
    %v187 = vsub.s32 %v184, %v186
    %v188 = vrot.slane %v180, %v187
    %v190 = vunpack.c.l.s4 1966171168
    %v191 = vunpack.c.0.s8 %v190
    %v192 = vlaneseq
    %v193 = vshrl.u32 %v192, 7
    %v194 = vsub.s32 %v191, %v193
    %v195 = vrot.slane %v181, %v194
    %v196 = vsel %vm172, 1, 0
    %vm197 = vcmp.eq.s32.totalorder %v196, 1
    %v198 = vlaneseq
    %v199 = vshrl.u32 %v198, 7
    %v200 = vsub.s32 0, %v199
    %v201 = vrot.slane %v188, %v200
    %v202 = vlaneseq
    %v203 = vshrl.u32 %v202, 7
    %v204 = vsub.s32 0, %v203
    %v205 = vrot.slane %v195, %v204
    %v208 = vsel %vm197, %v201, -1e+09
    %v209 = vsel %vm197, %v205, -1e+09
    %v210 = vld [vmem:[%s8] sm:$0xff]
    %v211 = vld [vmem:[%s8 + $0x8] sm:$0x1]
    %vm212 = vcmask 261120
    %v213 = vsel %vm212, %v165, 0.0
    %214 = vadd.xlane.f32.xlu0 %v213
    %v215 = vpop.xlane.xlu0 %214
    %v216 = vsel %vm212, %v166, 0.0
    %217 = vadd.xlane.f32.xlu0 %v216
    %v218 = vpop.xlane.xlu0 %217
    %v219 = vrcp.pop 32.0
    %v220 = vmul.f32 %v215, %v219
    %v221 = vmul.f32 %v218, %v219
    %v222 = vsub.f32 %v165, %v220
    %v223 = vsub.f32 %v166, %v221
    %v224 = vmul.f32 %v222, %v222
    %v225 = vmul.f32 %v223, %v223
    %v226 = vsel %vm212, %v224, 0.0
    %227 = vadd.xlane.f32.xlu0 %v226
    %v228 = vpop.xlane.xlu0 %227
    %v229 = vsel %vm212, %v225, 0.0
    %230 = vadd.xlane.f32.xlu0 %v229
    %v231 = vpop.xlane.xlu0 %230
    %v232 = vmul.f32 %v228, %v219
    %v233 = vmul.f32 %v231, %v219
    %v234 = vadd.f32 %v232, 1e-05
    %v235 = vadd.f32 %v233, 1e-05
    %v236 = vrsqrt.pop %v234
    %v237 = vrsqrt.pop %v235
    %v238 = vmul.f32 %v222, %v236
    %v239 = vmul.f32 %v223, %v237
    %v240 = vlaneseq
    %v241 = vshrl.u32 %v240, 7
    %v242 = vsub.s32 2, %v241
    %v243 = vrot.slane %v210, %v242
    %v244 = vmul.f32 %v238, %v243
    %v245 = vmul.f32 %v239, %v243
    %247 = vrot.lane.b32.xlu0 %v243, 96
    %v248 = vpop.permute.xlu0 %247
    %v250 = vadd.f32 %v244, %v248
    %v251 = vadd.f32 %v245, %v248
    %v252 = vpack.c.bf16 %v251, %v250
    %v253 = vld [vmem:[%s4] sm:$0xf]
    %v254 = vld [vmem:[%s4 + $0x4] sm:$0xf]
    %v255 = vld [vmem:[%s4 + $0x8] sm:$0xf]
    %v256 = vld [vmem:[%s4 + $0xc] sm:$0xf]
    %v257 = vlaneseq
    %v258 = vshrl.u32 %v257, 7
    %v259 = vsub.s32 0, %v258
    %v260 = vrot.slane %v210, %v259
    %v265 = vunpack.c.l.b16 %v253
    %v266 = vunpack.c.l.b16 %v254
    %v267 = vunpack.c.l.b16 %v255
    %v268 = vunpack.c.l.b16 %v256
    %v269 = vpack.c.b16 %v266, %v265
    %v270 = vpack.c.b16 %v268, %v267
    %v274 = vsel %vm212, %v252, 0
    %276 = vmatprep.subr.bf16.mxu0 0
    %277 = vmatpush1.bf16.msra.mxu0 0
    %278 = vmatprep.subr.bf16.mxu0 0
    %279 = vmatpush1.bf16.msra.mxu0 0
    %280 = vmatprep.subr.bf16.mxu0 0
    %281 = vmatpush1.bf16.msra.mxu0 0
    %282 = vmatprep.subr.bf16.mxu0 0
    %283 = vmatpush1.bf16.msra.mxu0 0
    %284 = vmatprep.subr.bf16.mxu0 0
    %285 = vmatpush1.bf16.msra.mxu0 0
    %286 = vmatprep.subr.bf16.mxu0 0
    %287 = vmatpush1.bf16.msra.mxu0 0
    %288 = vmatprep.subr.bf16.mxu0 0
    %289 = vmatpush1.bf16.msra.mxu0 %v270
    %290 = vmatprep.subr.bf16.mxu0 0
    %291 = vmatpush1.bf16.msra.mxu0 %v269
    %292 = vmatprep.subr.bf16.mxu0 0
    %293 = vmatpush2.bf16.msra.mxu0 0
    %294 = vmatprep.subr.bf16.mxu0 0
    %295 = vmatpush2.bf16.msra.mxu0 0
    %296 = vmatprep.subr.bf16.mxu0 0
    %297 = vmatpush2.bf16.msra.mxu0 0
    %298 = vmatprep.subr.bf16.mxu0 0
    %299 = vmatpush2.bf16.msra.mxu0 0
    %300 = vmatprep.subr.bf16.mxu0 0
    %301 = vmatpush2.bf16.msra.mxu0 0
    %302 = vmatprep.subr.bf16.mxu0 0
    %303 = vmatpush2.bf16.msra.mxu0 0
    %304 = vmatprep.subr.bf16.mxu0 0
    %305 = vmatpush2.bf16.msra.mxu0 0
    %306 = vmatprep.subr.bf16.mxu0 0
    %307 = vmatpush2.bf16.msra.mxu0 0
    %308 = vmatprep.mubr.bf16.mxu0 0
    %309 = vmatmul.mubr.bf16.gmra.mxu0 %v274
    %v310 = vpop.f32.mrf.mxu0
    %v311 = vadd.f32 %v260, %v310
    %v312 = vpop.f32.mrf.mxu0
    %v313 = vpop.f32.mrf.mxu0
    %v314 = vadd.f32 %v260, %v313
    %v315 = vpop.f32.mrf.mxu0
    %316 = vdwg.mxu0
    %319 = vrot.lane.b32.xlu0 %v311, 112
    %v320 = vpop.permute.xlu0 %319
    %321 = vrot.lane.b32.xlu0 %v314, 112
    %v322 = vpop.permute.xlu0 %321
    %v325 = vpack.c.bf16 %v311, %v311
    %v326 = vpack.c.bf16 %v314, %v314
    %v327 = vpack.c.bf16 %v320, %v320
    %v328 = vpack.c.bf16 %v322, %v322
    %330 = vrot.lane.b32.xlu0 %v325, 96
    %v331 = vpop.permute.xlu0 %330
    %vm332 = vcmask 130048
    %v334 = vsel %vm332, %v325, 0
    %v337 = vsel %vm332, %v331, 0
    %339 = vmatprep.subr.bf16.mxu0 0
    %340 = vmatpush1.bf16.xpose.msra.mxu0 0
    %341 = vmatprep.subr.bf16.mxu0 0
    %342 = vmatpush1.bf16.xpose.msra.mxu0 0
    %343 = vmatprep.subr.bf16.mxu0 0
    %344 = vmatpush1.bf16.xpose.msra.mxu0 0
    %345 = vmatprep.subr.bf16.mxu0 0
    %346 = vmatpush1.bf16.xpose.msra.mxu0 0
    %347 = vmatprep.subr.bf16.mxu0 0
    %348 = vmatpush1.bf16.xpose.msra.mxu0 0
    %349 = vmatprep.subr.bf16.mxu0 0
    %350 = vmatpush1.bf16.xpose.msra.mxu0 0
    %351 = vmatprep.subr.bf16.mxu0 0
    %352 = vmatpush1.bf16.xpose.msra.mxu0 0
    %353 = vmatprep.subr.bf16.mxu0 0
    %354 = vmatpush1.bf16.xpose.msra.mxu0 %v337
    %355 = vmatprep.subr.bf16.mxu0 0
    %356 = vmatpush2.bf16.xpose.msra.mxu0 0
    %357 = vmatprep.subr.bf16.mxu0 0
    %358 = vmatpush2.bf16.xpose.msra.mxu0 0
    %359 = vmatprep.subr.bf16.mxu0 0
    %360 = vmatpush2.bf16.xpose.msra.mxu0 0
    %361 = vmatprep.subr.bf16.mxu0 0
    %362 = vmatpush2.bf16.xpose.msra.mxu0 0
    %363 = vmatprep.subr.bf16.mxu0 0
    %364 = vmatpush2.bf16.xpose.msra.mxu0 0
    %365 = vmatprep.subr.bf16.mxu0 0
    %366 = vmatpush2.bf16.xpose.msra.mxu0 0
    %367 = vmatprep.subr.bf16.mxu0 0
    %368 = vmatpush2.bf16.xpose.msra.mxu0 0
    %369 = vmatprep.subr.bf16.mxu0 0
    %370 = vmatpush2.bf16.xpose.msra.mxu0 0
    %371 = vmatprep.mubr.bf16.mxu0 0
    %372 = vmatmul.mubr.bf16.gmra.mxu0 %v334
    %v373 = vpop.f32.mrf.mxu0
    %v374 = vadd.f32 %v208, %v373
    %v375 = vpop.f32.mrf.mxu0
    %v376 = vpop.f32.mrf.mxu0
    %v377 = vpop.f32.mrf.mxu0
    %378 = vdwg.mxu0
    %380 = vrot.lane.b32.xlu0 %v326, 96
    %v381 = vpop.permute.xlu0 %380
    %v383 = vsel %vm332, %v326, 0
    %v386 = vsel %vm332, %v381, 0
    %388 = vmatprep.subr.bf16.mxu0 0
    %389 = vmatpush1.bf16.xpose.msra.mxu0 0
    %390 = vmatprep.subr.bf16.mxu0 0
    %391 = vmatpush1.bf16.xpose.msra.mxu0 0
    %392 = vmatprep.subr.bf16.mxu0 0
    %393 = vmatpush1.bf16.xpose.msra.mxu0 0
    %394 = vmatprep.subr.bf16.mxu0 0
    %395 = vmatpush1.bf16.xpose.msra.mxu0 0
    %396 = vmatprep.subr.bf16.mxu0 0
    %397 = vmatpush1.bf16.xpose.msra.mxu0 0
    %398 = vmatprep.subr.bf16.mxu0 0
    %399 = vmatpush1.bf16.xpose.msra.mxu0 0
    %400 = vmatprep.subr.bf16.mxu0 0
    %401 = vmatpush1.bf16.xpose.msra.mxu0 0
    %402 = vmatprep.subr.bf16.mxu0 0
    %403 = vmatpush1.bf16.xpose.msra.mxu0 %v386
    %404 = vmatprep.subr.bf16.mxu0 0
    %405 = vmatpush2.bf16.xpose.msra.mxu0 0
    %406 = vmatprep.subr.bf16.mxu0 0
    %407 = vmatpush2.bf16.xpose.msra.mxu0 0
    %408 = vmatprep.subr.bf16.mxu0 0
    %409 = vmatpush2.bf16.xpose.msra.mxu0 0
    %410 = vmatprep.subr.bf16.mxu0 0
    %411 = vmatpush2.bf16.xpose.msra.mxu0 0
    %412 = vmatprep.subr.bf16.mxu0 0
    %413 = vmatpush2.bf16.xpose.msra.mxu0 0
    %414 = vmatprep.subr.bf16.mxu0 0
    %415 = vmatpush2.bf16.xpose.msra.mxu0 0
    %416 = vmatprep.subr.bf16.mxu0 0
    %417 = vmatpush2.bf16.xpose.msra.mxu0 0
    %418 = vmatprep.subr.bf16.mxu0 0
    %419 = vmatpush2.bf16.xpose.msra.mxu0 0
    %420 = vmatprep.mubr.bf16.mxu0 0
    %421 = vmatmul.mubr.bf16.gmra.mxu0 %v383
    %v422 = vpop.f32.mrf.mxu0
    %v423 = vadd.f32 %v209, %v422
    %v424 = vpop.f32.mrf.mxu0
    %v425 = vpop.f32.mrf.mxu0
    %v426 = vpop.f32.mrf.mxu0
    %427 = vdwg.mxu0
    %429 = vrot.lane.b32.xlu0 %v327, 96
    %v430 = vpop.permute.xlu0 %429
    %v432 = vsel %vm332, %v327, 0
    %v435 = vsel %vm332, %v430, 0
    %437 = vmatprep.subr.bf16.mxu0 0
    %438 = vmatpush1.bf16.xpose.msra.mxu0 0
    %439 = vmatprep.subr.bf16.mxu0 0
    %440 = vmatpush1.bf16.xpose.msra.mxu0 0
    %441 = vmatprep.subr.bf16.mxu0 0
    %442 = vmatpush1.bf16.xpose.msra.mxu0 0
    %443 = vmatprep.subr.bf16.mxu0 0
    %444 = vmatpush1.bf16.xpose.msra.mxu0 0
    %445 = vmatprep.subr.bf16.mxu0 0
    %446 = vmatpush1.bf16.xpose.msra.mxu0 0
    %447 = vmatprep.subr.bf16.mxu0 0
    %448 = vmatpush1.bf16.xpose.msra.mxu0 0
    %449 = vmatprep.subr.bf16.mxu0 0
    %450 = vmatpush1.bf16.xpose.msra.mxu0 0
    %451 = vmatprep.subr.bf16.mxu0 0
    %452 = vmatpush1.bf16.xpose.msra.mxu0 %v435
    %453 = vmatprep.subr.bf16.mxu0 0
    %454 = vmatpush2.bf16.xpose.msra.mxu0 0
    %455 = vmatprep.subr.bf16.mxu0 0
    %456 = vmatpush2.bf16.xpose.msra.mxu0 0
    %457 = vmatprep.subr.bf16.mxu0 0
    %458 = vmatpush2.bf16.xpose.msra.mxu0 0
    %459 = vmatprep.subr.bf16.mxu0 0
    %460 = vmatpush2.bf16.xpose.msra.mxu0 0
    %461 = vmatprep.subr.bf16.mxu0 0
    %462 = vmatpush2.bf16.xpose.msra.mxu0 0
    %463 = vmatprep.subr.bf16.mxu0 0
    %464 = vmatpush2.bf16.xpose.msra.mxu0 0
    %465 = vmatprep.subr.bf16.mxu0 0
    %466 = vmatpush2.bf16.xpose.msra.mxu0 0
    %467 = vmatprep.subr.bf16.mxu0 0
    %468 = vmatpush2.bf16.xpose.msra.mxu0 0
    %469 = vmatprep.mubr.bf16.mxu0 0
    %470 = vmatmul.mubr.bf16.gmra.mxu0 %v432
    %v471 = vpop.f32.mrf.mxu0
    %v472 = vadd.f32 %v208, %v471
    %v473 = vpop.f32.mrf.mxu0
    %v474 = vpop.f32.mrf.mxu0
    %v475 = vpop.f32.mrf.mxu0
    %476 = vdwg.mxu0
    %478 = vrot.lane.b32.xlu0 %v328, 96
    %v479 = vpop.permute.xlu0 %478
    %v481 = vsel %vm332, %v328, 0
    %v484 = vsel %vm332, %v479, 0
    %486 = vmatprep.subr.bf16.mxu0 0
    %487 = vmatpush1.bf16.xpose.msra.mxu0 0
    %488 = vmatprep.subr.bf16.mxu0 0
    %489 = vmatpush1.bf16.xpose.msra.mxu0 0
    %490 = vmatprep.subr.bf16.mxu0 0
    %491 = vmatpush1.bf16.xpose.msra.mxu0 0
    %492 = vmatprep.subr.bf16.mxu0 0
    %493 = vmatpush1.bf16.xpose.msra.mxu0 0
    %494 = vmatprep.subr.bf16.mxu0 0
    %495 = vmatpush1.bf16.xpose.msra.mxu0 0
    %496 = vmatprep.subr.bf16.mxu0 0
    %497 = vmatpush1.bf16.xpose.msra.mxu0 0
    %498 = vmatprep.subr.bf16.mxu0 0
    %499 = vmatpush1.bf16.xpose.msra.mxu0 0
    %500 = vmatprep.subr.bf16.mxu0 0
    %501 = vmatpush1.bf16.xpose.msra.mxu0 %v484
    %502 = vmatprep.subr.bf16.mxu0 0
    %503 = vmatpush2.bf16.xpose.msra.mxu0 0
    %504 = vmatprep.subr.bf16.mxu0 0
    %505 = vmatpush2.bf16.xpose.msra.mxu0 0
    %506 = vmatprep.subr.bf16.mxu0 0
    %507 = vmatpush2.bf16.xpose.msra.mxu0 0
    %508 = vmatprep.subr.bf16.mxu0 0
    %509 = vmatpush2.bf16.xpose.msra.mxu0 0
    %510 = vmatprep.subr.bf16.mxu0 0
    %511 = vmatpush2.bf16.xpose.msra.mxu0 0
    %512 = vmatprep.subr.bf16.mxu0 0
    %513 = vmatpush2.bf16.xpose.msra.mxu0 0
    %514 = vmatprep.subr.bf16.mxu0 0
    %515 = vmatpush2.bf16.xpose.msra.mxu0 0
    %516 = vmatprep.subr.bf16.mxu0 0
    %517 = vmatpush2.bf16.xpose.msra.mxu0 0
    %518 = vmatprep.mubr.bf16.mxu0 0
    %519 = vmatmul.mubr.bf16.gmra.mxu0 %v481
    %v520 = vpop.f32.mrf.mxu0
    %v521 = vadd.f32 %v209, %v520
    %v522 = vpop.f32.mrf.mxu0
    %v523 = vpop.f32.mrf.mxu0
    %v524 = vpop.f32.mrf.mxu0
    %525 = vdwg.mxu0
    %vm526 = vcmask 64512
    %v527 = vsel %vm526, %v374, -inf
    %528 = vmax.xlane.f32.xlu0 %v527
    %v529 = vpop.xlane.xlu0 %528
    %v530 = vsel %vm526, %v423, -inf
    %531 = vmax.xlane.f32.xlu0 %v530
    %v532 = vpop.xlane.xlu0 %531
    %v533 = vsel %vm526, %v472, -inf
    %534 = vmax.xlane.f32.xlu0 %v533
    %v535 = vpop.xlane.xlu0 %534
    %v536 = vsel %vm526, %v521, -inf
    %537 = vmax.xlane.f32.xlu0 %v536
    %v538 = vpop.xlane.xlu0 %537
    %v539 = vsub.f32 %v374, %v529
    %v540 = vsub.f32 %v423, %v532
    %v541 = vsub.f32 %v472, %v535
    %v542 = vsub.f32 %v521, %v538
    %v543 = vmul.f32 %v539, 1.442695
    %v544 = vpow.pop %v543
    %v545 = vmul.f32 %v540, 1.442695
    %v546 = vpow.pop %v545
    %v547 = vmul.f32 %v541, 1.442695
    %v548 = vpow.pop %v547
    %v549 = vmul.f32 %v542, 1.442695
    %v550 = vpow.pop %v549
    %v551 = vsel %vm526, %v544, 0.0
    %552 = vadd.xlane.f32.xlu0 %v551
    %v553 = vpop.xlane.xlu0 %552
    %v554 = vsel %vm526, %v546, 0.0
    %555 = vadd.xlane.f32.xlu0 %v554
    %v556 = vpop.xlane.xlu0 %555
    %v557 = vsel %vm526, %v548, 0.0
    %558 = vadd.xlane.f32.xlu0 %v557
    %v559 = vpop.xlane.xlu0 %558
    %v560 = vsel %vm526, %v550, 0.0
    %561 = vadd.xlane.f32.xlu0 %v560
    %v562 = vpop.xlane.xlu0 %561
    %v563 = vpack.c.bf16 %v544, %v544
    %v564 = vpack.c.bf16 %v546, %v546
    %v565 = vpack.c.bf16 %v548, %v548
    %v566 = vpack.c.bf16 %v550, %v550
    %567 = vrot.lane.b32.xlu0 %v325, 64
    %v568 = vpop.permute.xlu0 %567
    %v570 = vsel %vm526, %v563, 0
    %vm572 = vcmask 1043456
    %v574 = vsel %vm572, %v568, 0
    %576 = vmatprep.subr.bf16.mxu0 0
    %577 = vmatpush1.bf16.msra.mxu0 0
    %578 = vmatprep.subr.bf16.mxu0 0
    %579 = vmatpush1.bf16.msra.mxu0 0
    %580 = vmatprep.subr.bf16.mxu0 0
    %581 = vmatpush1.bf16.msra.mxu0 0
    %582 = vmatprep.subr.bf16.mxu0 0
    %583 = vmatpush1.bf16.msra.mxu0 0
    %584 = vmatprep.subr.bf16.mxu0 0
    %585 = vmatpush1.bf16.msra.mxu0 0
    %586 = vmatprep.subr.bf16.mxu0 0
    %587 = vmatpush1.bf16.msra.mxu0 0
    %588 = vmatprep.subr.bf16.mxu0 0
    %589 = vmatpush1.bf16.msra.mxu0 0
    %590 = vmatprep.subr.bf16.mxu0 0
    %591 = vmatpush1.bf16.msra.mxu0 %v574
    %592 = vmatprep.subr.bf16.mxu0 0
    %593 = vmatpush2.bf16.msra.mxu0 0
    %594 = vmatprep.subr.bf16.mxu0 0
    %595 = vmatpush2.bf16.msra.mxu0 0
    %596 = vmatprep.subr.bf16.mxu0 0
    %597 = vmatpush2.bf16.msra.mxu0 0
    %598 = vmatprep.subr.bf16.mxu0 0
    %599 = vmatpush2.bf16.msra.mxu0 0
    %600 = vmatprep.subr.bf16.mxu0 0
    %601 = vmatpush2.bf16.msra.mxu0 0
    %602 = vmatprep.subr.bf16.mxu0 0
    %603 = vmatpush2.bf16.msra.mxu0 0
    %604 = vmatprep.subr.bf16.mxu0 0
    %605 = vmatpush2.bf16.msra.mxu0 0
    %606 = vmatprep.subr.bf16.mxu0 0
    %607 = vmatpush2.bf16.msra.mxu0 0
    %608 = vmatprep.mubr.bf16.mxu0 0
    %609 = vmatmul.mubr.bf16.gmra.mxu0 %v570
    %v610 = vpop.f32.mrf.mxu0
    %v611 = vadd.f32 0.0, %v610
    %v612 = vpop.f32.mrf.mxu0
    %v613 = vpop.f32.mrf.mxu0
    %v614 = vpop.f32.mrf.mxu0
    %615 = vdwg.mxu0
    %616 = vrot.lane.b32.xlu0 %v326, 64
    %v617 = vpop.permute.xlu0 %616
    %v619 = vsel %vm526, %v564, 0
    %v622 = vsel %vm572, %v617, 0
    %624 = vmatprep.subr.bf16.mxu0 0
    %625 = vmatpush1.bf16.msra.mxu0 0
    %626 = vmatprep.subr.bf16.mxu0 0
    %627 = vmatpush1.bf16.msra.mxu0 0
    %628 = vmatprep.subr.bf16.mxu0 0
    %629 = vmatpush1.bf16.msra.mxu0 0
    %630 = vmatprep.subr.bf16.mxu0 0
    %631 = vmatpush1.bf16.msra.mxu0 0
    %632 = vmatprep.subr.bf16.mxu0 0
    %633 = vmatpush1.bf16.msra.mxu0 0
    %634 = vmatprep.subr.bf16.mxu0 0
    %635 = vmatpush1.bf16.msra.mxu0 0
    %636 = vmatprep.subr.bf16.mxu0 0
    %637 = vmatpush1.bf16.msra.mxu0 0
    %638 = vmatprep.subr.bf16.mxu0 0
    %639 = vmatpush1.bf16.msra.mxu0 %v622
    %640 = vmatprep.subr.bf16.mxu0 0
    %641 = vmatpush2.bf16.msra.mxu0 0
    %642 = vmatprep.subr.bf16.mxu0 0
    %643 = vmatpush2.bf16.msra.mxu0 0
    %644 = vmatprep.subr.bf16.mxu0 0
    %645 = vmatpush2.bf16.msra.mxu0 0
    %646 = vmatprep.subr.bf16.mxu0 0
    %647 = vmatpush2.bf16.msra.mxu0 0
    %648 = vmatprep.subr.bf16.mxu0 0
    %649 = vmatpush2.bf16.msra.mxu0 0
    %650 = vmatprep.subr.bf16.mxu0 0
    %651 = vmatpush2.bf16.msra.mxu0 0
    %652 = vmatprep.subr.bf16.mxu0 0
    %653 = vmatpush2.bf16.msra.mxu0 0
    %654 = vmatprep.subr.bf16.mxu0 0
    %655 = vmatpush2.bf16.msra.mxu0 0
    %656 = vmatprep.mubr.bf16.mxu0 0
    %657 = vmatmul.mubr.bf16.gmra.mxu0 %v619
    %v658 = vpop.f32.mrf.mxu0
    %v659 = vadd.f32 0.0, %v658
    %v660 = vpop.f32.mrf.mxu0
    %v661 = vpop.f32.mrf.mxu0
    %v662 = vpop.f32.mrf.mxu0
    %663 = vdwg.mxu0
    %664 = vrot.lane.b32.xlu0 %v327, 64
    %v665 = vpop.permute.xlu0 %664
    %v667 = vsel %vm526, %v565, 0
    %v670 = vsel %vm572, %v665, 0
    %672 = vmatprep.subr.bf16.mxu0 0
    %673 = vmatpush1.bf16.msra.mxu0 0
    %674 = vmatprep.subr.bf16.mxu0 0
    %675 = vmatpush1.bf16.msra.mxu0 0
    %676 = vmatprep.subr.bf16.mxu0 0
    %677 = vmatpush1.bf16.msra.mxu0 0
    %678 = vmatprep.subr.bf16.mxu0 0
    %679 = vmatpush1.bf16.msra.mxu0 0
    %680 = vmatprep.subr.bf16.mxu0 0
    %681 = vmatpush1.bf16.msra.mxu0 0
    %682 = vmatprep.subr.bf16.mxu0 0
    %683 = vmatpush1.bf16.msra.mxu0 0
    %684 = vmatprep.subr.bf16.mxu0 0
    %685 = vmatpush1.bf16.msra.mxu0 0
    %686 = vmatprep.subr.bf16.mxu0 0
    %687 = vmatpush1.bf16.msra.mxu0 %v670
    %688 = vmatprep.subr.bf16.mxu0 0
    %689 = vmatpush2.bf16.msra.mxu0 0
    %690 = vmatprep.subr.bf16.mxu0 0
    %691 = vmatpush2.bf16.msra.mxu0 0
    %692 = vmatprep.subr.bf16.mxu0 0
    %693 = vmatpush2.bf16.msra.mxu0 0
    %694 = vmatprep.subr.bf16.mxu0 0
    %695 = vmatpush2.bf16.msra.mxu0 0
    %696 = vmatprep.subr.bf16.mxu0 0
    %697 = vmatpush2.bf16.msra.mxu0 0
    %698 = vmatprep.subr.bf16.mxu0 0
    %699 = vmatpush2.bf16.msra.mxu0 0
    %700 = vmatprep.subr.bf16.mxu0 0
    %701 = vmatpush2.bf16.msra.mxu0 0
    %702 = vmatprep.subr.bf16.mxu0 0
    %703 = vmatpush2.bf16.msra.mxu0 0
    %704 = vmatprep.mubr.bf16.mxu0 0
    %705 = vmatmul.mubr.bf16.gmra.mxu0 %v667
    %v706 = vpop.f32.mrf.mxu0
    %v707 = vadd.f32 0.0, %v706
    %v708 = vpop.f32.mrf.mxu0
    %v709 = vpop.f32.mrf.mxu0
    %v710 = vpop.f32.mrf.mxu0
    %711 = vdwg.mxu0
    %712 = vrot.lane.b32.xlu0 %v328, 64
    %v713 = vpop.permute.xlu0 %712
    %v715 = vsel %vm526, %v566, 0
    %v718 = vsel %vm572, %v713, 0
    %720 = vmatprep.subr.bf16.mxu0 0
    %721 = vmatpush1.bf16.msra.mxu0 0
    %722 = vmatprep.subr.bf16.mxu0 0
    %723 = vmatpush1.bf16.msra.mxu0 0
    %724 = vmatprep.subr.bf16.mxu0 0
    %725 = vmatpush1.bf16.msra.mxu0 0
    %726 = vmatprep.subr.bf16.mxu0 0
    %727 = vmatpush1.bf16.msra.mxu0 0
    %728 = vmatprep.subr.bf16.mxu0 0
    %729 = vmatpush1.bf16.msra.mxu0 0
    %730 = vmatprep.subr.bf16.mxu0 0
    %731 = vmatpush1.bf16.msra.mxu0 0
    %732 = vmatprep.subr.bf16.mxu0 0
    %733 = vmatpush1.bf16.msra.mxu0 0
    %734 = vmatprep.subr.bf16.mxu0 0
    %735 = vmatpush1.bf16.msra.mxu0 %v718
    %736 = vmatprep.subr.bf16.mxu0 0
    %737 = vmatpush2.bf16.msra.mxu0 0
    %738 = vmatprep.subr.bf16.mxu0 0
    %739 = vmatpush2.bf16.msra.mxu0 0
    %740 = vmatprep.subr.bf16.mxu0 0
    %741 = vmatpush2.bf16.msra.mxu0 0
    %742 = vmatprep.subr.bf16.mxu0 0
    %743 = vmatpush2.bf16.msra.mxu0 0
    %744 = vmatprep.subr.bf16.mxu0 0
    %745 = vmatpush2.bf16.msra.mxu0 0
    %746 = vmatprep.subr.bf16.mxu0 0
    %747 = vmatpush2.bf16.msra.mxu0 0
    %748 = vmatprep.subr.bf16.mxu0 0
    %749 = vmatpush2.bf16.msra.mxu0 0
    %750 = vmatprep.subr.bf16.mxu0 0
    %751 = vmatpush2.bf16.msra.mxu0 0
    %752 = vmatprep.mubr.bf16.mxu0 0
    %753 = vmatmul.mubr.bf16.gmra.mxu0 %v715
    %v754 = vpop.f32.mrf.mxu0
    %v755 = vadd.f32 0.0, %v754
    %v756 = vpop.f32.mrf.mxu0
    %v757 = vpop.f32.mrf.mxu0
    %v758 = vpop.f32.mrf.mxu0
    %759 = vdwg.mxu0
    %v760 = vrcp.pop %v553
    %v761 = vrcp.pop %v556
    %v762 = vrcp.pop %v559
    %v763 = vrcp.pop %v562
    %v764 = vmul.f32 %v611, %v760
    %v765 = vmul.f32 %v659, %v761
    %v766 = vmul.f32 %v707, %v762
    %v767 = vmul.f32 %v755, %v763
    %770 = vrot.lane.b32.xlu0 %v766, 16
    %v771 = vpop.permute.xlu0 %770
    %772 = vrot.lane.b32.xlu0 %v767, 16
    %v773 = vpop.permute.xlu0 %772
    %v776 = vsel %vm332, %v764, %v771
    %v777 = vsel %vm332, %v765, %v773
    %v778 = vpack.c.bf16 %v777, %v776
    %v779 = vld [vmem:[%s5] sm:$0xf]
    %v780 = vld [vmem:[%s5 + $0x4] sm:$0xf]
    %v781 = vld [vmem:[%s5 + $0x8] sm:$0xf]
    %v782 = vld [vmem:[%s5 + $0xc] sm:$0xf]
    %v787 = vunpack.c.l.b16 %v779
    %v788 = vunpack.c.l.b16 %v780
    %v789 = vunpack.c.l.b16 %v781
    %v790 = vunpack.c.l.b16 %v782
    %v791 = vpack.c.b16 %v788, %v787
    %v792 = vpack.c.b16 %v790, %v789
    %v796 = vsel %vm212, %v778, 0
    %798 = vmatprep.subr.bf16.mxu0 0
    %799 = vmatpush1.bf16.msra.mxu0 0
    %800 = vmatprep.subr.bf16.mxu0 0
    %801 = vmatpush1.bf16.msra.mxu0 0
    %802 = vmatprep.subr.bf16.mxu0 0
    %803 = vmatpush1.bf16.msra.mxu0 0
    %804 = vmatprep.subr.bf16.mxu0 0
    %805 = vmatpush1.bf16.msra.mxu0 0
    %806 = vmatprep.subr.bf16.mxu0 0
    %807 = vmatpush1.bf16.msra.mxu0 0
    %808 = vmatprep.subr.bf16.mxu0 0
    %809 = vmatpush1.bf16.msra.mxu0 0
    %810 = vmatprep.subr.bf16.mxu0 0
    %811 = vmatpush1.bf16.msra.mxu0 %v792
    %812 = vmatprep.subr.bf16.mxu0 0
    %813 = vmatpush1.bf16.msra.mxu0 %v791
    %814 = vmatprep.subr.bf16.mxu0 0
    %815 = vmatpush2.bf16.msra.mxu0 0
    %816 = vmatprep.subr.bf16.mxu0 0
    %817 = vmatpush2.bf16.msra.mxu0 0
    %818 = vmatprep.subr.bf16.mxu0 0
    %819 = vmatpush2.bf16.msra.mxu0 0
    %820 = vmatprep.subr.bf16.mxu0 0
    %821 = vmatpush2.bf16.msra.mxu0 0
    %822 = vmatprep.subr.bf16.mxu0 0
    %823 = vmatpush2.bf16.msra.mxu0 0
    %824 = vmatprep.subr.bf16.mxu0 0
    %825 = vmatpush2.bf16.msra.mxu0 0
    %826 = vmatprep.subr.bf16.mxu0 0
    %827 = vmatpush2.bf16.msra.mxu0 0
    %828 = vmatprep.subr.bf16.mxu0 0
    %829 = vmatpush2.bf16.msra.mxu0 0
    %830 = vmatprep.mubr.bf16.mxu0 0
    %831 = vmatmul.mubr.bf16.gmra.mxu0 %v796
    %v832 = vpop.f32.mrf.mxu0
    %v833 = vadd.f32 0.0, %v832
    %v834 = vpop.f32.mrf.mxu0
    %v835 = vpop.f32.mrf.mxu0
    %v836 = vadd.f32 0.0, %v835
    %v837 = vpop.f32.mrf.mxu0
    %838 = vdwg.mxu0
    %v839 = vadd.f32 %v165, %v833
    %v840 = vadd.f32 %v166, %v836
    %v841 = vlaneseq
    %v842 = vshrl.u32 %v841, 7
    %v843 = vsub.s32 3, %v842
    %v844 = vrot.slane %v210, %v843
    %v845 = vadd.f32 %v839, %v844
    %v846 = vadd.f32 %v840, %v844
    %v847 = vsel %vm212, %v845, 0.0
    %848 = vadd.xlane.f32.xlu0 %v847
    %v849 = vpop.xlane.xlu0 %848
    %v850 = vsel %vm212, %v846, 0.0
    %851 = vadd.xlane.f32.xlu0 %v850
    %v852 = vpop.xlane.xlu0 %851
    %v853 = vmul.f32 %v849, %v219
    %v854 = vmul.f32 %v852, %v219
    %v855 = vsub.f32 %v845, %v853
    %v856 = vsub.f32 %v846, %v854
    %v857 = vmul.f32 %v855, %v855
    %v858 = vmul.f32 %v856, %v856
    %v859 = vsel %vm212, %v857, 0.0
    %860 = vadd.xlane.f32.xlu0 %v859
    %v861 = vpop.xlane.xlu0 %860
    %v862 = vsel %vm212, %v858, 0.0
    %863 = vadd.xlane.f32.xlu0 %v862
    %v864 = vpop.xlane.xlu0 %863
    %v865 = vmul.f32 %v861, %v219
    %v866 = vmul.f32 %v864, %v219
    %v867 = vadd.f32 %v865, 1e-05
    %v868 = vadd.f32 %v866, 1e-05
    %v869 = vrsqrt.pop %v867
    %v870 = vrsqrt.pop %v868
    %v871 = vmul.f32 %v855, %v869
    %v872 = vmul.f32 %v856, %v870
    %873 = vrot.lane.b32.xlu0 %v243, 64
    %v874 = vpop.permute.xlu0 %873
    %v876 = vmul.f32 %v871, %v874
    %v877 = vmul.f32 %v872, %v874
    %878 = vrot.lane.b32.xlu0 %v243, 32
    %v879 = vpop.permute.xlu0 %878
    %v881 = vadd.f32 %v876, %v879
    %v882 = vadd.f32 %v877, %v879
    %v883 = vpack.c.bf16 %v882, %v881
    %v884 = vld [vmem:[%s6] sm:$0xf]
    %v885 = vld [vmem:[%s6 + $0x4] sm:$0xf]
    %v886 = vld [vmem:[%s6 + $0x8] sm:$0xf]
    %v887 = vld [vmem:[%s6 + $0xc] sm:$0xf]
    %v888 = vlaneseq
    %v889 = vshrl.u32 %v888, 7
    %v890 = vsub.s32 1, %v889
    %v891 = vrot.slane %v210, %v890
    %v896 = vunpack.c.l.b16 %v884
    %v897 = vunpack.c.l.b16 %v885
    %v898 = vunpack.c.l.b16 %v886
    %v899 = vunpack.c.l.b16 %v887
    %v900 = vpack.c.b16 %v897, %v896
    %v901 = vpack.c.b16 %v899, %v898
    %v905 = vsel %vm212, %v883, 0
    %907 = vmatprep.subr.bf16.mxu0 0
    %908 = vmatpush1.bf16.msra.mxu0 0
    %909 = vmatprep.subr.bf16.mxu0 0
    %910 = vmatpush1.bf16.msra.mxu0 0
    %911 = vmatprep.subr.bf16.mxu0 0
    %912 = vmatpush1.bf16.msra.mxu0 0
    %913 = vmatprep.subr.bf16.mxu0 0
    %914 = vmatpush1.bf16.msra.mxu0 0
    %915 = vmatprep.subr.bf16.mxu0 0
    %916 = vmatpush1.bf16.msra.mxu0 0
    %917 = vmatprep.subr.bf16.mxu0 0
    %918 = vmatpush1.bf16.msra.mxu0 0
    %919 = vmatprep.subr.bf16.mxu0 0
    %920 = vmatpush1.bf16.msra.mxu0 %v901
    %921 = vmatprep.subr.bf16.mxu0 0
    %922 = vmatpush1.bf16.msra.mxu0 %v900
    %923 = vmatprep.subr.bf16.mxu0 0
    %924 = vmatpush2.bf16.msra.mxu0 0
    %925 = vmatprep.subr.bf16.mxu0 0
    %926 = vmatpush2.bf16.msra.mxu0 0
    %927 = vmatprep.subr.bf16.mxu0 0
    %928 = vmatpush2.bf16.msra.mxu0 0
    %929 = vmatprep.subr.bf16.mxu0 0
    %930 = vmatpush2.bf16.msra.mxu0 0
    %931 = vmatprep.subr.bf16.mxu0 0
    %932 = vmatpush2.bf16.msra.mxu0 0
    %933 = vmatprep.subr.bf16.mxu0 0
    %934 = vmatpush2.bf16.msra.mxu0 0
    %935 = vmatprep.subr.bf16.mxu0 0
    %936 = vmatpush2.bf16.msra.mxu0 0
    %937 = vmatprep.subr.bf16.mxu0 0
    %938 = vmatpush2.bf16.msra.mxu0 0
    %939 = vmatprep.mubr.bf16.mxu0 0
    %940 = vmatmul.mubr.bf16.gmra.mxu0 %v905
    %v941 = vpop.f32.mrf.mxu0
    %v942 = vadd.f32 %v891, %v941
    %v943 = vpop.f32.mrf.mxu0
    %v944 = vpop.f32.mrf.mxu0
    %v945 = vadd.f32 %v891, %v944
    %v946 = vpop.f32.mrf.mxu0
    %947 = vdwg.mxu0
    %v948 = vmul.f32 %v942, 0.5
    %v949 = vmul.f32 %v945, 0.5
    %v950 = vmul.f32 %v942, 0.044715
    %v951 = vmul.f32 %v945, 0.044715
    %v952 = vmul.f32 %v950, %v942
    %v953 = vmul.f32 %v951, %v945
    %v954 = vmul.f32 %v952, %v942
    %v955 = vmul.f32 %v953, %v945
    %v956 = vadd.f32 %v942, %v954
    %v957 = vadd.f32 %v945, %v955
    %v958 = vmul.f32 %v956, 0.7978846
    %v959 = vmul.f32 %v957, 0.7978846
    %v960 = vtanh.pop %v958
    %v961 = vtanh.pop %v959
    %v962 = vadd.f32 %v960, 1.0
    %v963 = vadd.f32 %v961, 1.0
    %v964 = vmul.f32 %v948, %v962
    %v965 = vmul.f32 %v949, %v963
    %v966 = vpack.c.bf16 %v965, %v964
    %v967 = vld [vmem:[%s7] sm:$0xf]
    %v968 = vld [vmem:[%s7 + $0x4] sm:$0xf]
    %v969 = vld [vmem:[%s7 + $0x8] sm:$0xf]
    %v970 = vld [vmem:[%s7 + $0xc] sm:$0xf]
    %v971 = vld [vmem:[%s7 + $0x10] sm:$0xf]
    %v972 = vld [vmem:[%s7 + $0x14] sm:$0xf]
    %v973 = vld [vmem:[%s7 + $0x18] sm:$0xf]
    %v974 = vld [vmem:[%s7 + $0x1c] sm:$0xf]
    %v975 = vld [vmem:[%s7 + $0x20] sm:$0xf]
    %v976 = vld [vmem:[%s7 + $0x24] sm:$0xf]
    %v977 = vld [vmem:[%s7 + $0x28] sm:$0xf]
    %v978 = vld [vmem:[%s7 + $0x2c] sm:$0xf]
    %v979 = vld [vmem:[%s7 + $0x30] sm:$0xf]
    %v980 = vld [vmem:[%s7 + $0x34] sm:$0xf]
    %v981 = vld [vmem:[%s7 + $0x38] sm:$0xf]
    %v982 = vld [vmem:[%s7 + $0x3c] sm:$0xf]
    %v999 = vunpack.c.l.b16 %v967
    %v1000 = vunpack.c.l.b16 %v968
    %v1001 = vunpack.c.l.b16 %v969
    %v1002 = vunpack.c.l.b16 %v970
    %v1003 = vunpack.c.l.b16 %v971
    %v1004 = vunpack.c.l.b16 %v972
    %v1005 = vunpack.c.l.b16 %v973
    %v1006 = vunpack.c.l.b16 %v974
    %v1007 = vunpack.c.l.b16 %v975
    %v1008 = vunpack.c.l.b16 %v976
    %v1009 = vunpack.c.l.b16 %v977
    %v1010 = vunpack.c.l.b16 %v978
    %v1011 = vunpack.c.l.b16 %v979
    %v1012 = vunpack.c.l.b16 %v980
    %v1013 = vunpack.c.l.b16 %v981
    %v1014 = vunpack.c.l.b16 %v982
    %v1015 = vpack.c.b16 %v1000, %v999
    %v1016 = vpack.c.b16 %v1002, %v1001
    %v1017 = vpack.c.b16 %v1004, %v1003
    %v1018 = vpack.c.b16 %v1006, %v1005
    %v1019 = vpack.c.b16 %v1008, %v1007
    %v1020 = vpack.c.b16 %v1010, %v1009
    %v1021 = vpack.c.b16 %v1012, %v1011
    %v1022 = vpack.c.b16 %v1014, %v1013
    %1031 = vmatprep.subr.bf16.mxu0 0
    %1032 = vmatpush1.bf16.msra.mxu0 %v1022
    %1033 = vmatprep.subr.bf16.mxu0 0
    %1034 = vmatpush1.bf16.msra.mxu0 %v1021
    %1035 = vmatprep.subr.bf16.mxu0 0
    %1036 = vmatpush1.bf16.msra.mxu0 %v1020
    %1037 = vmatprep.subr.bf16.mxu0 0
    %1038 = vmatpush1.bf16.msra.mxu0 %v1019
    %1039 = vmatprep.subr.bf16.mxu0 0
    %1040 = vmatpush1.bf16.msra.mxu0 %v1018
    %1041 = vmatprep.subr.bf16.mxu0 0
    %1042 = vmatpush1.bf16.msra.mxu0 %v1017
    %1043 = vmatprep.subr.bf16.mxu0 0
    %1044 = vmatpush1.bf16.msra.mxu0 %v1016
    %1045 = vmatprep.subr.bf16.mxu0 0
    %1046 = vmatpush1.bf16.msra.mxu0 %v1015
    %1047 = vmatprep.subr.bf16.mxu0 0
    %1048 = vmatpush2.bf16.msra.mxu0 0
    %1049 = vmatprep.subr.bf16.mxu0 0
    %1050 = vmatpush2.bf16.msra.mxu0 0
    %1051 = vmatprep.subr.bf16.mxu0 0
    %1052 = vmatpush2.bf16.msra.mxu0 0
    %1053 = vmatprep.subr.bf16.mxu0 0
    %1054 = vmatpush2.bf16.msra.mxu0 0
    %1055 = vmatprep.subr.bf16.mxu0 0
    %1056 = vmatpush2.bf16.msra.mxu0 0
    %1057 = vmatprep.subr.bf16.mxu0 0
    %1058 = vmatpush2.bf16.msra.mxu0 0
    %1059 = vmatprep.subr.bf16.mxu0 0
    %1060 = vmatpush2.bf16.msra.mxu0 0
    %1061 = vmatprep.subr.bf16.mxu0 0
    %1062 = vmatpush2.bf16.msra.mxu0 0
    %1063 = vmatprep.mubr.bf16.mxu0 0
    %1064 = vmatmul.mubr.bf16.gmra.mxu0 %v966
    %v1065 = vpop.f32.mrf.mxu0
    %v1066 = vadd.f32 0.0, %v1065
    %v1067 = vpop.f32.mrf.mxu0
    %v1068 = vpop.f32.mrf.mxu0
    %v1069 = vadd.f32 0.0, %v1068
    %v1070 = vpop.f32.mrf.mxu0
    %1071 = vdwg.mxu0
    %v1072 = vadd.f32 %v845, %v1066
    %v1073 = vadd.f32 %v846, %v1069
    %1075 = vrot.lane.b32.xlu0 %v844, 96
    %v1076 = vpop.permute.xlu0 %1075
    %v1078 = vadd.f32 %v1072, %v1076
    %v1079 = vadd.f32 %v1073, %v1076
    %v1080 = vsel %vm212, %v1078, 0.0
    %1081 = vadd.xlane.f32.xlu0 %v1080
    %v1082 = vpop.xlane.xlu0 %1081
    %v1083 = vsel %vm212, %v1079, 0.0
    %1084 = vadd.xlane.f32.xlu0 %v1083
    %v1085 = vpop.xlane.xlu0 %1084
    %v1086 = vmul.f32 %v1082, %v219
    %v1087 = vmul.f32 %v1085, %v219
    %v1088 = vsub.f32 %v1078, %v1086
    %v1089 = vsub.f32 %v1079, %v1087
    %v1090 = vmul.f32 %v1088, %v1088
    %v1091 = vmul.f32 %v1089, %v1089
    %v1092 = vsel %vm212, %v1090, 0.0
    %1093 = vadd.xlane.f32.xlu0 %v1092
    %v1094 = vpop.xlane.xlu0 %1093
    %v1095 = vsel %vm212, %v1091, 0.0
    %1096 = vadd.xlane.f32.xlu0 %v1095
    %v1097 = vpop.xlane.xlu0 %1096
    %v1098 = vmul.f32 %v1094, %v219
    %v1099 = vmul.f32 %v1097, %v219
    %v1100 = vadd.f32 %v1098, 1e-05
    %v1101 = vadd.f32 %v1099, 1e-05
    %v1102 = vrsqrt.pop %v1100
    %v1103 = vrsqrt.pop %v1101
    %v1104 = vmul.f32 %v1088, %v1102
    %v1105 = vmul.f32 %v1089, %v1103
    %v1106 = vlaneseq
    %v1107 = vshrl.u32 %v1106, 7
    %v1108 = vsub.s32 6, %v1107
    %v1109 = vrot.slane %v210, %v1108
    %v1110 = vmul.f32 %v1104, %v1109
    %v1111 = vmul.f32 %v1105, %v1109
    %1113 = vrot.lane.b32.xlu0 %v1109, 96
    %v1114 = vpop.permute.xlu0 %1113
    %v1116 = vadd.f32 %v1110, %v1114
    %v1117 = vadd.f32 %v1111, %v1114
    %v1118 = vpack.c.bf16 %v1117, %v1116
    %s1119 = scalar_lea.vmem %s4, 16
    %v1120 = vld [vmem:[%s1119] sm:$0xf]
    %v1121 = vld [vmem:[%s1119 + $0x4] sm:$0xf]
    %v1122 = vld [vmem:[%s1119 + $0x8] sm:$0xf]
    %v1123 = vld [vmem:[%s1119 + $0xc] sm:$0xf]
    %v1124 = vlaneseq
    %v1125 = vshrl.u32 %v1124, 7
    %v1126 = vsub.s32 4, %v1125
    %v1127 = vrot.slane %v210, %v1126
    %v1132 = vunpack.c.l.b16 %v1120
    %v1133 = vunpack.c.l.b16 %v1121
    %v1134 = vunpack.c.l.b16 %v1122
    %v1135 = vunpack.c.l.b16 %v1123
    %v1136 = vpack.c.b16 %v1133, %v1132
    %v1137 = vpack.c.b16 %v1135, %v1134
    %v1141 = vsel %vm212, %v1118, 0
    %1143 = vmatprep.subr.bf16.mxu0 0
    %1144 = vmatpush1.bf16.msra.mxu0 0
    %1145 = vmatprep.subr.bf16.mxu0 0
    %1146 = vmatpush1.bf16.msra.mxu0 0
    %1147 = vmatprep.subr.bf16.mxu0 0
    %1148 = vmatpush1.bf16.msra.mxu0 0
    %1149 = vmatprep.subr.bf16.mxu0 0
    %1150 = vmatpush1.bf16.msra.mxu0 0
    %1151 = vmatprep.subr.bf16.mxu0 0
    %1152 = vmatpush1.bf16.msra.mxu0 0
    %1153 = vmatprep.subr.bf16.mxu0 0
    %1154 = vmatpush1.bf16.msra.mxu0 0
    %1155 = vmatprep.subr.bf16.mxu0 0
    %1156 = vmatpush1.bf16.msra.mxu0 %v1137
    %1157 = vmatprep.subr.bf16.mxu0 0
    %1158 = vmatpush1.bf16.msra.mxu0 %v1136
    %1159 = vmatprep.subr.bf16.mxu0 0
    %1160 = vmatpush2.bf16.msra.mxu0 0
    %1161 = vmatprep.subr.bf16.mxu0 0
    %1162 = vmatpush2.bf16.msra.mxu0 0
    %1163 = vmatprep.subr.bf16.mxu0 0
    %1164 = vmatpush2.bf16.msra.mxu0 0
    %1165 = vmatprep.subr.bf16.mxu0 0
    %1166 = vmatpush2.bf16.msra.mxu0 0
    %1167 = vmatprep.subr.bf16.mxu0 0
    %1168 = vmatpush2.bf16.msra.mxu0 0
    %1169 = vmatprep.subr.bf16.mxu0 0
    %1170 = vmatpush2.bf16.msra.mxu0 0
    %1171 = vmatprep.subr.bf16.mxu0 0
    %1172 = vmatpush2.bf16.msra.mxu0 0
    %1173 = vmatprep.subr.bf16.mxu0 0
    %1174 = vmatpush2.bf16.msra.mxu0 0
    %1175 = vmatprep.mubr.bf16.mxu0 0
    %1176 = vmatmul.mubr.bf16.gmra.mxu0 %v1141
    %v1177 = vpop.f32.mrf.mxu0
    %v1178 = vadd.f32 %v1127, %v1177
    %v1179 = vpop.f32.mrf.mxu0
    %v1180 = vpop.f32.mrf.mxu0
    %v1181 = vadd.f32 %v1127, %v1180
    %v1182 = vpop.f32.mrf.mxu0
    %1183 = vdwg.mxu0
    %1186 = vrot.lane.b32.xlu0 %v1178, 112
    %v1187 = vpop.permute.xlu0 %1186
    %1188 = vrot.lane.b32.xlu0 %v1181, 112
    %v1189 = vpop.permute.xlu0 %1188
    %v1192 = vpack.c.bf16 %v1178, %v1178
    %v1193 = vpack.c.bf16 %v1181, %v1181
    %v1194 = vpack.c.bf16 %v1187, %v1187
    %v1195 = vpack.c.bf16 %v1189, %v1189
    %1197 = vrot.lane.b32.xlu0 %v1192, 96
    %v1198 = vpop.permute.xlu0 %1197
    %v1200 = vsel %vm332, %v1192, 0
    %v1203 = vsel %vm332, %v1198, 0
    %1205 = vmatprep.subr.bf16.mxu0 0
    %1206 = vmatpush1.bf16.xpose.msra.mxu0 0
    %1207 = vmatprep.subr.bf16.mxu0 0
    %1208 = vmatpush1.bf16.xpose.msra.mxu0 0
    %1209 = vmatprep.subr.bf16.mxu0 0
    %1210 = vmatpush1.bf16.xpose.msra.mxu0 0
    %1211 = vmatprep.subr.bf16.mxu0 0
    %1212 = vmatpush1.bf16.xpose.msra.mxu0 0
    %1213 = vmatprep.subr.bf16.mxu0 0
    %1214 = vmatpush1.bf16.xpose.msra.mxu0 0
    %1215 = vmatprep.subr.bf16.mxu0 0
    %1216 = vmatpush1.bf16.xpose.msra.mxu0 0
    %1217 = vmatprep.subr.bf16.mxu0 0
    %1218 = vmatpush1.bf16.xpose.msra.mxu0 0
    %1219 = vmatprep.subr.bf16.mxu0 0
    %1220 = vmatpush1.bf16.xpose.msra.mxu0 %v1203
    %1221 = vmatprep.subr.bf16.mxu0 0
    %1222 = vmatpush2.bf16.xpose.msra.mxu0 0
    %1223 = vmatprep.subr.bf16.mxu0 0
    %1224 = vmatpush2.bf16.xpose.msra.mxu0 0
    %1225 = vmatprep.subr.bf16.mxu0 0
    %1226 = vmatpush2.bf16.xpose.msra.mxu0 0
    %1227 = vmatprep.subr.bf16.mxu0 0
    %1228 = vmatpush2.bf16.xpose.msra.mxu0 0
    %1229 = vmatprep.subr.bf16.mxu0 0
    %1230 = vmatpush2.bf16.xpose.msra.mxu0 0
    %1231 = vmatprep.subr.bf16.mxu0 0
    %1232 = vmatpush2.bf16.xpose.msra.mxu0 0
    %1233 = vmatprep.subr.bf16.mxu0 0
    %1234 = vmatpush2.bf16.xpose.msra.mxu0 0
    %1235 = vmatprep.subr.bf16.mxu0 0
    %1236 = vmatpush2.bf16.xpose.msra.mxu0 0
    %1237 = vmatprep.mubr.bf16.mxu0 0
    %1238 = vmatmul.mubr.bf16.gmra.mxu0 %v1200
    %v1239 = vpop.f32.mrf.mxu0
    %v1240 = vadd.f32 %v208, %v1239
    %v1241 = vpop.f32.mrf.mxu0
    %v1242 = vpop.f32.mrf.mxu0
    %v1243 = vpop.f32.mrf.mxu0
    %1244 = vdwg.mxu0
    %1246 = vrot.lane.b32.xlu0 %v1193, 96
    %v1247 = vpop.permute.xlu0 %1246
    %v1249 = vsel %vm332, %v1193, 0
    %v1252 = vsel %vm332, %v1247, 0
    %1254 = vmatprep.subr.bf16.mxu0 0
    %1255 = vmatpush1.bf16.xpose.msra.mxu0 0
    %1256 = vmatprep.subr.bf16.mxu0 0
    %1257 = vmatpush1.bf16.xpose.msra.mxu0 0
    %1258 = vmatprep.subr.bf16.mxu0 0
    %1259 = vmatpush1.bf16.xpose.msra.mxu0 0
    %1260 = vmatprep.subr.bf16.mxu0 0
    %1261 = vmatpush1.bf16.xpose.msra.mxu0 0
    %1262 = vmatprep.subr.bf16.mxu0 0
    %1263 = vmatpush1.bf16.xpose.msra.mxu0 0
    %1264 = vmatprep.subr.bf16.mxu0 0
    %1265 = vmatpush1.bf16.xpose.msra.mxu0 0
    %1266 = vmatprep.subr.bf16.mxu0 0
    %1267 = vmatpush1.bf16.xpose.msra.mxu0 0
    %1268 = vmatprep.subr.bf16.mxu0 0
    %1269 = vmatpush1.bf16.xpose.msra.mxu0 %v1252
    %1270 = vmatprep.subr.bf16.mxu0 0
    %1271 = vmatpush2.bf16.xpose.msra.mxu0 0
    %1272 = vmatprep.subr.bf16.mxu0 0
    %1273 = vmatpush2.bf16.xpose.msra.mxu0 0
    %1274 = vmatprep.subr.bf16.mxu0 0
    %1275 = vmatpush2.bf16.xpose.msra.mxu0 0
    %1276 = vmatprep.subr.bf16.mxu0 0
    %1277 = vmatpush2.bf16.xpose.msra.mxu0 0
    %1278 = vmatprep.subr.bf16.mxu0 0
    %1279 = vmatpush2.bf16.xpose.msra.mxu0 0
    %1280 = vmatprep.subr.bf16.mxu0 0
    %1281 = vmatpush2.bf16.xpose.msra.mxu0 0
    %1282 = vmatprep.subr.bf16.mxu0 0
    %1283 = vmatpush2.bf16.xpose.msra.mxu0 0
    %1284 = vmatprep.subr.bf16.mxu0 0
    %1285 = vmatpush2.bf16.xpose.msra.mxu0 0
    %1286 = vmatprep.mubr.bf16.mxu0 0
    %1287 = vmatmul.mubr.bf16.gmra.mxu0 %v1249
    %v1288 = vpop.f32.mrf.mxu0
    %v1289 = vadd.f32 %v209, %v1288
    %v1290 = vpop.f32.mrf.mxu0
    %v1291 = vpop.f32.mrf.mxu0
    %v1292 = vpop.f32.mrf.mxu0
    %1293 = vdwg.mxu0
    %1295 = vrot.lane.b32.xlu0 %v1194, 96
    %v1296 = vpop.permute.xlu0 %1295
    %v1298 = vsel %vm332, %v1194, 0
    %v1301 = vsel %vm332, %v1296, 0
    %1303 = vmatprep.subr.bf16.mxu0 0
    %1304 = vmatpush1.bf16.xpose.msra.mxu0 0
    %1305 = vmatprep.subr.bf16.mxu0 0
    %1306 = vmatpush1.bf16.xpose.msra.mxu0 0
    %1307 = vmatprep.subr.bf16.mxu0 0
    %1308 = vmatpush1.bf16.xpose.msra.mxu0 0
    %1309 = vmatprep.subr.bf16.mxu0 0
    %1310 = vmatpush1.bf16.xpose.msra.mxu0 0
    %1311 = vmatprep.subr.bf16.mxu0 0
    %1312 = vmatpush1.bf16.xpose.msra.mxu0 0
    %1313 = vmatprep.subr.bf16.mxu0 0
    %1314 = vmatpush1.bf16.xpose.msra.mxu0 0
    %1315 = vmatprep.subr.bf16.mxu0 0
    %1316 = vmatpush1.bf16.xpose.msra.mxu0 0
    %1317 = vmatprep.subr.bf16.mxu0 0
    %1318 = vmatpush1.bf16.xpose.msra.mxu0 %v1301
    %1319 = vmatprep.subr.bf16.mxu0 0
    %1320 = vmatpush2.bf16.xpose.msra.mxu0 0
    %1321 = vmatprep.subr.bf16.mxu0 0
    %1322 = vmatpush2.bf16.xpose.msra.mxu0 0
    %1323 = vmatprep.subr.bf16.mxu0 0
    %1324 = vmatpush2.bf16.xpose.msra.mxu0 0
    %1325 = vmatprep.subr.bf16.mxu0 0
    %1326 = vmatpush2.bf16.xpose.msra.mxu0 0
    %1327 = vmatprep.subr.bf16.mxu0 0
    %1328 = vmatpush2.bf16.xpose.msra.mxu0 0
    %1329 = vmatprep.subr.bf16.mxu0 0
    %1330 = vmatpush2.bf16.xpose.msra.mxu0 0
    %1331 = vmatprep.subr.bf16.mxu0 0
    %1332 = vmatpush2.bf16.xpose.msra.mxu0 0
    %1333 = vmatprep.subr.bf16.mxu0 0
    %1334 = vmatpush2.bf16.xpose.msra.mxu0 0
    %1335 = vmatprep.mubr.bf16.mxu0 0
    %1336 = vmatmul.mubr.bf16.gmra.mxu0 %v1298
    %v1337 = vpop.f32.mrf.mxu0
    %v1338 = vadd.f32 %v208, %v1337
    %v1339 = vpop.f32.mrf.mxu0
    %v1340 = vpop.f32.mrf.mxu0
    %v1341 = vpop.f32.mrf.mxu0
    %1342 = vdwg.mxu0
    %1344 = vrot.lane.b32.xlu0 %v1195, 96
    %v1345 = vpop.permute.xlu0 %1344
    %v1347 = vsel %vm332, %v1195, 0
    %v1350 = vsel %vm332, %v1345, 0
    %1352 = vmatprep.subr.bf16.mxu0 0
    %1353 = vmatpush1.bf16.xpose.msra.mxu0 0
    %1354 = vmatprep.subr.bf16.mxu0 0
    %1355 = vmatpush1.bf16.xpose.msra.mxu0 0
    %1356 = vmatprep.subr.bf16.mxu0 0
    %1357 = vmatpush1.bf16.xpose.msra.mxu0 0
    %1358 = vmatprep.subr.bf16.mxu0 0
    %1359 = vmatpush1.bf16.xpose.msra.mxu0 0
    %1360 = vmatprep.subr.bf16.mxu0 0
    %1361 = vmatpush1.bf16.xpose.msra.mxu0 0
    %1362 = vmatprep.subr.bf16.mxu0 0
    %1363 = vmatpush1.bf16.xpose.msra.mxu0 0
    %1364 = vmatprep.subr.bf16.mxu0 0
    %1365 = vmatpush1.bf16.xpose.msra.mxu0 0
    %1366 = vmatprep.subr.bf16.mxu0 0
    %1367 = vmatpush1.bf16.xpose.msra.mxu0 %v1350
    %1368 = vmatprep.subr.bf16.mxu0 0
    %1369 = vmatpush2.bf16.xpose.msra.mxu0 0
    %1370 = vmatprep.subr.bf16.mxu0 0
    %1371 = vmatpush2.bf16.xpose.msra.mxu0 0
    %1372 = vmatprep.subr.bf16.mxu0 0
    %1373 = vmatpush2.bf16.xpose.msra.mxu0 0
    %1374 = vmatprep.subr.bf16.mxu0 0
    %1375 = vmatpush2.bf16.xpose.msra.mxu0 0
    %1376 = vmatprep.subr.bf16.mxu0 0
    %1377 = vmatpush2.bf16.xpose.msra.mxu0 0
    %1378 = vmatprep.subr.bf16.mxu0 0
    %1379 = vmatpush2.bf16.xpose.msra.mxu0 0
    %1380 = vmatprep.subr.bf16.mxu0 0
    %1381 = vmatpush2.bf16.xpose.msra.mxu0 0
    %1382 = vmatprep.subr.bf16.mxu0 0
    %1383 = vmatpush2.bf16.xpose.msra.mxu0 0
    %1384 = vmatprep.mubr.bf16.mxu0 0
    %1385 = vmatmul.mubr.bf16.gmra.mxu0 %v1347
    %v1386 = vpop.f32.mrf.mxu0
    %v1387 = vadd.f32 %v209, %v1386
    %v1388 = vpop.f32.mrf.mxu0
    %v1389 = vpop.f32.mrf.mxu0
    %v1390 = vpop.f32.mrf.mxu0
    %1391 = vdwg.mxu0
    %v1392 = vsel %vm526, %v1240, -inf
    %1393 = vmax.xlane.f32.xlu0 %v1392
    %v1394 = vpop.xlane.xlu0 %1393
    %v1395 = vsel %vm526, %v1289, -inf
    %1396 = vmax.xlane.f32.xlu0 %v1395
    %v1397 = vpop.xlane.xlu0 %1396
    %v1398 = vsel %vm526, %v1338, -inf
    %1399 = vmax.xlane.f32.xlu0 %v1398
    %v1400 = vpop.xlane.xlu0 %1399
    %v1401 = vsel %vm526, %v1387, -inf
    %1402 = vmax.xlane.f32.xlu0 %v1401
    %v1403 = vpop.xlane.xlu0 %1402
    %v1404 = vsub.f32 %v1240, %v1394
    %v1405 = vsub.f32 %v1289, %v1397
    %v1406 = vsub.f32 %v1338, %v1400
    %v1407 = vsub.f32 %v1387, %v1403
    %v1408 = vmul.f32 %v1404, 1.442695
    %v1409 = vpow.pop %v1408
    %v1410 = vmul.f32 %v1405, 1.442695
    %v1411 = vpow.pop %v1410
    %v1412 = vmul.f32 %v1406, 1.442695
    %v1413 = vpow.pop %v1412
    %v1414 = vmul.f32 %v1407, 1.442695
    %v1415 = vpow.pop %v1414
    %v1416 = vsel %vm526, %v1409, 0.0
    %1417 = vadd.xlane.f32.xlu0 %v1416
    %v1418 = vpop.xlane.xlu0 %1417
    %v1419 = vsel %vm526, %v1411, 0.0
    %1420 = vadd.xlane.f32.xlu0 %v1419
    %v1421 = vpop.xlane.xlu0 %1420
    %v1422 = vsel %vm526, %v1413, 0.0
    %1423 = vadd.xlane.f32.xlu0 %v1422
    %v1424 = vpop.xlane.xlu0 %1423
    %v1425 = vsel %vm526, %v1415, 0.0
    %1426 = vadd.xlane.f32.xlu0 %v1425
    %v1427 = vpop.xlane.xlu0 %1426
    %v1428 = vpack.c.bf16 %v1409, %v1409
    %v1429 = vpack.c.bf16 %v1411, %v1411
    %v1430 = vpack.c.bf16 %v1413, %v1413
    %v1431 = vpack.c.bf16 %v1415, %v1415
    %1432 = vrot.lane.b32.xlu0 %v1192, 64
    %v1433 = vpop.permute.xlu0 %1432
    %v1435 = vsel %vm526, %v1428, 0
    %v1438 = vsel %vm572, %v1433, 0
    %1440 = vmatprep.subr.bf16.mxu0 0
    %1441 = vmatpush1.bf16.msra.mxu0 0
    %1442 = vmatprep.subr.bf16.mxu0 0
    %1443 = vmatpush1.bf16.msra.mxu0 0
    %1444 = vmatprep.subr.bf16.mxu0 0
    %1445 = vmatpush1.bf16.msra.mxu0 0
    %1446 = vmatprep.subr.bf16.mxu0 0
    %1447 = vmatpush1.bf16.msra.mxu0 0
    %1448 = vmatprep.subr.bf16.mxu0 0
    %1449 = vmatpush1.bf16.msra.mxu0 0
    %1450 = vmatprep.subr.bf16.mxu0 0
    %1451 = vmatpush1.bf16.msra.mxu0 0
    %1452 = vmatprep.subr.bf16.mxu0 0
    %1453 = vmatpush1.bf16.msra.mxu0 0
    %1454 = vmatprep.subr.bf16.mxu0 0
    %1455 = vmatpush1.bf16.msra.mxu0 %v1438
    %1456 = vmatprep.subr.bf16.mxu0 0
    %1457 = vmatpush2.bf16.msra.mxu0 0
    %1458 = vmatprep.subr.bf16.mxu0 0
    %1459 = vmatpush2.bf16.msra.mxu0 0
    %1460 = vmatprep.subr.bf16.mxu0 0
    %1461 = vmatpush2.bf16.msra.mxu0 0
    %1462 = vmatprep.subr.bf16.mxu0 0
    %1463 = vmatpush2.bf16.msra.mxu0 0
    %1464 = vmatprep.subr.bf16.mxu0 0
    %1465 = vmatpush2.bf16.msra.mxu0 0
    %1466 = vmatprep.subr.bf16.mxu0 0
    %1467 = vmatpush2.bf16.msra.mxu0 0
    %1468 = vmatprep.subr.bf16.mxu0 0
    %1469 = vmatpush2.bf16.msra.mxu0 0
    %1470 = vmatprep.subr.bf16.mxu0 0
    %1471 = vmatpush2.bf16.msra.mxu0 0
    %1472 = vmatprep.mubr.bf16.mxu0 0
    %1473 = vmatmul.mubr.bf16.gmra.mxu0 %v1435
    %v1474 = vpop.f32.mrf.mxu0
    %v1475 = vadd.f32 0.0, %v1474
    %v1476 = vpop.f32.mrf.mxu0
    %v1477 = vpop.f32.mrf.mxu0
    %v1478 = vpop.f32.mrf.mxu0
    %1479 = vdwg.mxu0
    %1480 = vrot.lane.b32.xlu0 %v1193, 64
    %v1481 = vpop.permute.xlu0 %1480
    %v1483 = vsel %vm526, %v1429, 0
    %v1486 = vsel %vm572, %v1481, 0
    %1488 = vmatprep.subr.bf16.mxu0 0
    %1489 = vmatpush1.bf16.msra.mxu0 0
    %1490 = vmatprep.subr.bf16.mxu0 0
    %1491 = vmatpush1.bf16.msra.mxu0 0
    %1492 = vmatprep.subr.bf16.mxu0 0
    %1493 = vmatpush1.bf16.msra.mxu0 0
    %1494 = vmatprep.subr.bf16.mxu0 0
    %1495 = vmatpush1.bf16.msra.mxu0 0
    %1496 = vmatprep.subr.bf16.mxu0 0
    %1497 = vmatpush1.bf16.msra.mxu0 0
    %1498 = vmatprep.subr.bf16.mxu0 0
    %1499 = vmatpush1.bf16.msra.mxu0 0
    %1500 = vmatprep.subr.bf16.mxu0 0
    %1501 = vmatpush1.bf16.msra.mxu0 0
    %1502 = vmatprep.subr.bf16.mxu0 0
    %1503 = vmatpush1.bf16.msra.mxu0 %v1486
    %1504 = vmatprep.subr.bf16.mxu0 0
    %1505 = vmatpush2.bf16.msra.mxu0 0
    %1506 = vmatprep.subr.bf16.mxu0 0
    %1507 = vmatpush2.bf16.msra.mxu0 0
    %1508 = vmatprep.subr.bf16.mxu0 0
    %1509 = vmatpush2.bf16.msra.mxu0 0
    %1510 = vmatprep.subr.bf16.mxu0 0
    %1511 = vmatpush2.bf16.msra.mxu0 0
    %1512 = vmatprep.subr.bf16.mxu0 0
    %1513 = vmatpush2.bf16.msra.mxu0 0
    %1514 = vmatprep.subr.bf16.mxu0 0
    %1515 = vmatpush2.bf16.msra.mxu0 0
    %1516 = vmatprep.subr.bf16.mxu0 0
    %1517 = vmatpush2.bf16.msra.mxu0 0
    %1518 = vmatprep.subr.bf16.mxu0 0
    %1519 = vmatpush2.bf16.msra.mxu0 0
    %1520 = vmatprep.mubr.bf16.mxu0 0
    %1521 = vmatmul.mubr.bf16.gmra.mxu0 %v1483
    %v1522 = vpop.f32.mrf.mxu0
    %v1523 = vadd.f32 0.0, %v1522
    %v1524 = vpop.f32.mrf.mxu0
    %v1525 = vpop.f32.mrf.mxu0
    %v1526 = vpop.f32.mrf.mxu0
    %1527 = vdwg.mxu0
    %1528 = vrot.lane.b32.xlu0 %v1194, 64
    %v1529 = vpop.permute.xlu0 %1528
    %v1531 = vsel %vm526, %v1430, 0
    %v1534 = vsel %vm572, %v1529, 0
    %1536 = vmatprep.subr.bf16.mxu0 0
    %1537 = vmatpush1.bf16.msra.mxu0 0
    %1538 = vmatprep.subr.bf16.mxu0 0
    %1539 = vmatpush1.bf16.msra.mxu0 0
    %1540 = vmatprep.subr.bf16.mxu0 0
    %1541 = vmatpush1.bf16.msra.mxu0 0
    %1542 = vmatprep.subr.bf16.mxu0 0
    %1543 = vmatpush1.bf16.msra.mxu0 0
    %1544 = vmatprep.subr.bf16.mxu0 0
    %1545 = vmatpush1.bf16.msra.mxu0 0
    %1546 = vmatprep.subr.bf16.mxu0 0
    %1547 = vmatpush1.bf16.msra.mxu0 0
    %1548 = vmatprep.subr.bf16.mxu0 0
    %1549 = vmatpush1.bf16.msra.mxu0 0
    %1550 = vmatprep.subr.bf16.mxu0 0
    %1551 = vmatpush1.bf16.msra.mxu0 %v1534
    %1552 = vmatprep.subr.bf16.mxu0 0
    %1553 = vmatpush2.bf16.msra.mxu0 0
    %1554 = vmatprep.subr.bf16.mxu0 0
    %1555 = vmatpush2.bf16.msra.mxu0 0
    %1556 = vmatprep.subr.bf16.mxu0 0
    %1557 = vmatpush2.bf16.msra.mxu0 0
    %1558 = vmatprep.subr.bf16.mxu0 0
    %1559 = vmatpush2.bf16.msra.mxu0 0
    %1560 = vmatprep.subr.bf16.mxu0 0
    %1561 = vmatpush2.bf16.msra.mxu0 0
    %1562 = vmatprep.subr.bf16.mxu0 0
    %1563 = vmatpush2.bf16.msra.mxu0 0
    %1564 = vmatprep.subr.bf16.mxu0 0
    %1565 = vmatpush2.bf16.msra.mxu0 0
    %1566 = vmatprep.subr.bf16.mxu0 0
    %1567 = vmatpush2.bf16.msra.mxu0 0
    %1568 = vmatprep.mubr.bf16.mxu0 0
    %1569 = vmatmul.mubr.bf16.gmra.mxu0 %v1531
    %v1570 = vpop.f32.mrf.mxu0
    %v1571 = vadd.f32 0.0, %v1570
    %v1572 = vpop.f32.mrf.mxu0
    %v1573 = vpop.f32.mrf.mxu0
    %v1574 = vpop.f32.mrf.mxu0
    %1575 = vdwg.mxu0
    %1576 = vrot.lane.b32.xlu0 %v1195, 64
    %v1577 = vpop.permute.xlu0 %1576
    %v1579 = vsel %vm526, %v1431, 0
    %v1582 = vsel %vm572, %v1577, 0
    %1584 = vmatprep.subr.bf16.mxu0 0
    %1585 = vmatpush1.bf16.msra.mxu0 0
    %1586 = vmatprep.subr.bf16.mxu0 0
    %1587 = vmatpush1.bf16.msra.mxu0 0
    %1588 = vmatprep.subr.bf16.mxu0 0
    %1589 = vmatpush1.bf16.msra.mxu0 0
    %1590 = vmatprep.subr.bf16.mxu0 0
    %1591 = vmatpush1.bf16.msra.mxu0 0
    %1592 = vmatprep.subr.bf16.mxu0 0
    %1593 = vmatpush1.bf16.msra.mxu0 0
    %1594 = vmatprep.subr.bf16.mxu0 0
    %1595 = vmatpush1.bf16.msra.mxu0 0
    %1596 = vmatprep.subr.bf16.mxu0 0
    %1597 = vmatpush1.bf16.msra.mxu0 0
    %1598 = vmatprep.subr.bf16.mxu0 0
    %1599 = vmatpush1.bf16.msra.mxu0 %v1582
    %1600 = vmatprep.subr.bf16.mxu0 0
    %1601 = vmatpush2.bf16.msra.mxu0 0
    %1602 = vmatprep.subr.bf16.mxu0 0
    %1603 = vmatpush2.bf16.msra.mxu0 0
    %1604 = vmatprep.subr.bf16.mxu0 0
    %1605 = vmatpush2.bf16.msra.mxu0 0
    %1606 = vmatprep.subr.bf16.mxu0 0
    %1607 = vmatpush2.bf16.msra.mxu0 0
    %1608 = vmatprep.subr.bf16.mxu0 0
    %1609 = vmatpush2.bf16.msra.mxu0 0
    %1610 = vmatprep.subr.bf16.mxu0 0
    %1611 = vmatpush2.bf16.msra.mxu0 0
    %1612 = vmatprep.subr.bf16.mxu0 0
    %1613 = vmatpush2.bf16.msra.mxu0 0
    %1614 = vmatprep.subr.bf16.mxu0 0
    %1615 = vmatpush2.bf16.msra.mxu0 0
    %1616 = vmatprep.mubr.bf16.mxu0 0
    %1617 = vmatmul.mubr.bf16.gmra.mxu0 %v1579
    %v1618 = vpop.f32.mrf.mxu0
    %v1619 = vadd.f32 0.0, %v1618
    %v1620 = vpop.f32.mrf.mxu0
    %v1621 = vpop.f32.mrf.mxu0
    %v1622 = vpop.f32.mrf.mxu0
    %1623 = vdwg.mxu0
    %v1624 = vrcp.pop %v1418
    %v1625 = vrcp.pop %v1421
    %v1626 = vrcp.pop %v1424
    %v1627 = vrcp.pop %v1427
    %v1628 = vmul.f32 %v1475, %v1624
    %v1629 = vmul.f32 %v1523, %v1625
    %v1630 = vmul.f32 %v1571, %v1626
    %v1631 = vmul.f32 %v1619, %v1627
    %1634 = vrot.lane.b32.xlu0 %v1630, 16
    %v1635 = vpop.permute.xlu0 %1634
    %1636 = vrot.lane.b32.xlu0 %v1631, 16
    %v1637 = vpop.permute.xlu0 %1636
    %v1640 = vsel %vm332, %v1628, %v1635
    %v1641 = vsel %vm332, %v1629, %v1637
    %v1642 = vpack.c.bf16 %v1641, %v1640
    %s1643 = scalar_lea.vmem %s5, 16
    %v1644 = vld [vmem:[%s1643] sm:$0xf]
    %v1645 = vld [vmem:[%s1643 + $0x4] sm:$0xf]
    %v1646 = vld [vmem:[%s1643 + $0x8] sm:$0xf]
    %v1647 = vld [vmem:[%s1643 + $0xc] sm:$0xf]
    %v1652 = vunpack.c.l.b16 %v1644
    %v1653 = vunpack.c.l.b16 %v1645
    %v1654 = vunpack.c.l.b16 %v1646
    %v1655 = vunpack.c.l.b16 %v1647
    %v1656 = vpack.c.b16 %v1653, %v1652
    %v1657 = vpack.c.b16 %v1655, %v1654
    %v1661 = vsel %vm212, %v1642, 0
    %1663 = vmatprep.subr.bf16.mxu0 0
    %1664 = vmatpush1.bf16.msra.mxu0 0
    %1665 = vmatprep.subr.bf16.mxu0 0
    %1666 = vmatpush1.bf16.msra.mxu0 0
    %1667 = vmatprep.subr.bf16.mxu0 0
    %1668 = vmatpush1.bf16.msra.mxu0 0
    %1669 = vmatprep.subr.bf16.mxu0 0
    %1670 = vmatpush1.bf16.msra.mxu0 0
    %1671 = vmatprep.subr.bf16.mxu0 0
    %1672 = vmatpush1.bf16.msra.mxu0 0
    %1673 = vmatprep.subr.bf16.mxu0 0
    %1674 = vmatpush1.bf16.msra.mxu0 0
    %1675 = vmatprep.subr.bf16.mxu0 0
    %1676 = vmatpush1.bf16.msra.mxu0 %v1657
    %1677 = vmatprep.subr.bf16.mxu0 0
    %1678 = vmatpush1.bf16.msra.mxu0 %v1656
    %1679 = vmatprep.subr.bf16.mxu0 0
    %1680 = vmatpush2.bf16.msra.mxu0 0
    %1681 = vmatprep.subr.bf16.mxu0 0
    %1682 = vmatpush2.bf16.msra.mxu0 0
    %1683 = vmatprep.subr.bf16.mxu0 0
    %1684 = vmatpush2.bf16.msra.mxu0 0
    %1685 = vmatprep.subr.bf16.mxu0 0
    %1686 = vmatpush2.bf16.msra.mxu0 0
    %1687 = vmatprep.subr.bf16.mxu0 0
    %1688 = vmatpush2.bf16.msra.mxu0 0
    %1689 = vmatprep.subr.bf16.mxu0 0
    %1690 = vmatpush2.bf16.msra.mxu0 0
    %1691 = vmatprep.subr.bf16.mxu0 0
    %1692 = vmatpush2.bf16.msra.mxu0 0
    %1693 = vmatprep.subr.bf16.mxu0 0
    %1694 = vmatpush2.bf16.msra.mxu0 0
    %1695 = vmatprep.mubr.bf16.mxu0 0
    %1696 = vmatmul.mubr.bf16.gmra.mxu0 %v1661
    %v1697 = vpop.f32.mrf.mxu0
    %v1698 = vadd.f32 0.0, %v1697
    %v1699 = vpop.f32.mrf.mxu0
    %v1700 = vpop.f32.mrf.mxu0
    %v1701 = vadd.f32 0.0, %v1700
    %v1702 = vpop.f32.mrf.mxu0
    %1703 = vdwg.mxu0
    %v1704 = vadd.f32 %v1078, %v1698
    %v1705 = vadd.f32 %v1079, %v1701
    %v1706 = vlaneseq
    %v1707 = vshrl.u32 %v1706, 7
    %v1708 = vsub.s32 7, %v1707
    %v1709 = vrot.slane %v210, %v1708
    %v1710 = vadd.f32 %v1704, %v1709
    %v1711 = vadd.f32 %v1705, %v1709
    %v1712 = vsel %vm212, %v1710, 0.0
    %1713 = vadd.xlane.f32.xlu0 %v1712
    %v1714 = vpop.xlane.xlu0 %1713
    %v1715 = vsel %vm212, %v1711, 0.0
    %1716 = vadd.xlane.f32.xlu0 %v1715
    %v1717 = vpop.xlane.xlu0 %1716
    %v1718 = vmul.f32 %v1714, %v219
    %v1719 = vmul.f32 %v1717, %v219
    %v1720 = vsub.f32 %v1710, %v1718
    %v1721 = vsub.f32 %v1711, %v1719
    %v1722 = vmul.f32 %v1720, %v1720
    %v1723 = vmul.f32 %v1721, %v1721
    %v1724 = vsel %vm212, %v1722, 0.0
    %1725 = vadd.xlane.f32.xlu0 %v1724
    %v1726 = vpop.xlane.xlu0 %1725
    %v1727 = vsel %vm212, %v1723, 0.0
    %1728 = vadd.xlane.f32.xlu0 %v1727
    %v1729 = vpop.xlane.xlu0 %1728
    %v1730 = vmul.f32 %v1726, %v219
    %v1731 = vmul.f32 %v1729, %v219
    %v1732 = vadd.f32 %v1730, 1e-05
    %v1733 = vadd.f32 %v1731, 1e-05
    %v1734 = vrsqrt.pop %v1732
    %v1735 = vrsqrt.pop %v1733
    %v1736 = vmul.f32 %v1720, %v1734
    %v1737 = vmul.f32 %v1721, %v1735
    %1738 = vrot.lane.b32.xlu0 %v1109, 64
    %v1739 = vpop.permute.xlu0 %1738
    %v1741 = vmul.f32 %v1736, %v1739
    %v1742 = vmul.f32 %v1737, %v1739
    %1743 = vrot.lane.b32.xlu0 %v1109, 32
    %v1744 = vpop.permute.xlu0 %1743
    %v1746 = vadd.f32 %v1741, %v1744
    %v1747 = vadd.f32 %v1742, %v1744
    %v1748 = vpack.c.bf16 %v1747, %v1746
    %s1749 = scalar_lea.vmem %s6, 16
    %v1750 = vld [vmem:[%s1749] sm:$0xf]
    %v1751 = vld [vmem:[%s1749 + $0x4] sm:$0xf]
    %v1752 = vld [vmem:[%s1749 + $0x8] sm:$0xf]
    %v1753 = vld [vmem:[%s1749 + $0xc] sm:$0xf]
    %v1754 = vlaneseq
    %v1755 = vshrl.u32 %v1754, 7
    %v1756 = vsub.s32 5, %v1755
    %v1757 = vrot.slane %v210, %v1756
    %v1762 = vunpack.c.l.b16 %v1750
    %v1763 = vunpack.c.l.b16 %v1751
    %v1764 = vunpack.c.l.b16 %v1752
    %v1765 = vunpack.c.l.b16 %v1753
    %v1766 = vpack.c.b16 %v1763, %v1762
    %v1767 = vpack.c.b16 %v1765, %v1764
    %v1771 = vsel %vm212, %v1748, 0
    %1773 = vmatprep.subr.bf16.mxu0 0
    %1774 = vmatpush1.bf16.msra.mxu0 0
    %1775 = vmatprep.subr.bf16.mxu0 0
    %1776 = vmatpush1.bf16.msra.mxu0 0
    %1777 = vmatprep.subr.bf16.mxu0 0
    %1778 = vmatpush1.bf16.msra.mxu0 0
    %1779 = vmatprep.subr.bf16.mxu0 0
    %1780 = vmatpush1.bf16.msra.mxu0 0
    %1781 = vmatprep.subr.bf16.mxu0 0
    %1782 = vmatpush1.bf16.msra.mxu0 0
    %1783 = vmatprep.subr.bf16.mxu0 0
    %1784 = vmatpush1.bf16.msra.mxu0 0
    %1785 = vmatprep.subr.bf16.mxu0 0
    %1786 = vmatpush1.bf16.msra.mxu0 %v1767
    %1787 = vmatprep.subr.bf16.mxu0 0
    %1788 = vmatpush1.bf16.msra.mxu0 %v1766
    %1789 = vmatprep.subr.bf16.mxu0 0
    %1790 = vmatpush2.bf16.msra.mxu0 0
    %1791 = vmatprep.subr.bf16.mxu0 0
    %1792 = vmatpush2.bf16.msra.mxu0 0
    %1793 = vmatprep.subr.bf16.mxu0 0
    %1794 = vmatpush2.bf16.msra.mxu0 0
    %1795 = vmatprep.subr.bf16.mxu0 0
    %1796 = vmatpush2.bf16.msra.mxu0 0
    %1797 = vmatprep.subr.bf16.mxu0 0
    %1798 = vmatpush2.bf16.msra.mxu0 0
    %1799 = vmatprep.subr.bf16.mxu0 0
    %1800 = vmatpush2.bf16.msra.mxu0 0
    %1801 = vmatprep.subr.bf16.mxu0 0
    %1802 = vmatpush2.bf16.msra.mxu0 0
    %1803 = vmatprep.subr.bf16.mxu0 0
    %1804 = vmatpush2.bf16.msra.mxu0 0
    %1805 = vmatprep.mubr.bf16.mxu0 0
    %1806 = vmatmul.mubr.bf16.gmra.mxu0 %v1771
    %v1807 = vpop.f32.mrf.mxu0
    %v1808 = vadd.f32 %v1757, %v1807
    %v1809 = vpop.f32.mrf.mxu0
    %v1810 = vpop.f32.mrf.mxu0
    %v1811 = vadd.f32 %v1757, %v1810
    %v1812 = vpop.f32.mrf.mxu0
    %1813 = vdwg.mxu0
    %v1814 = vmul.f32 %v1808, 0.5
    %v1815 = vmul.f32 %v1811, 0.5
    %v1816 = vmul.f32 %v1808, 0.044715
    %v1817 = vmul.f32 %v1811, 0.044715
    %v1818 = vmul.f32 %v1816, %v1808
    %v1819 = vmul.f32 %v1817, %v1811
    %v1820 = vmul.f32 %v1818, %v1808
    %v1821 = vmul.f32 %v1819, %v1811
    %v1822 = vadd.f32 %v1808, %v1820
    %v1823 = vadd.f32 %v1811, %v1821
    %v1824 = vmul.f32 %v1822, 0.7978846
    %v1825 = vmul.f32 %v1823, 0.7978846
    %v1826 = vtanh.pop %v1824
    %v1827 = vtanh.pop %v1825
    %v1828 = vadd.f32 %v1826, 1.0
    %v1829 = vadd.f32 %v1827, 1.0
    %v1830 = vmul.f32 %v1814, %v1828
    %v1831 = vmul.f32 %v1815, %v1829
    %v1832 = vpack.c.bf16 %v1831, %v1830
    %s1833 = scalar_lea.vmem %s7, 64
    %v1834 = vld [vmem:[%s1833] sm:$0xf]
    %v1835 = vld [vmem:[%s1833 + $0x4] sm:$0xf]
    %v1836 = vld [vmem:[%s1833 + $0x8] sm:$0xf]
    %v1837 = vld [vmem:[%s1833 + $0xc] sm:$0xf]
    %v1838 = vld [vmem:[%s1833 + $0x10] sm:$0xf]
    %v1839 = vld [vmem:[%s1833 + $0x14] sm:$0xf]
    %v1840 = vld [vmem:[%s1833 + $0x18] sm:$0xf]
    %v1841 = vld [vmem:[%s1833 + $0x1c] sm:$0xf]
    %v1842 = vld [vmem:[%s1833 + $0x20] sm:$0xf]
    %v1843 = vld [vmem:[%s1833 + $0x24] sm:$0xf]
    %v1844 = vld [vmem:[%s1833 + $0x28] sm:$0xf]
    %v1845 = vld [vmem:[%s1833 + $0x2c] sm:$0xf]
    %v1846 = vld [vmem:[%s1833 + $0x30] sm:$0xf]
    %v1847 = vld [vmem:[%s1833 + $0x34] sm:$0xf]
    %v1848 = vld [vmem:[%s1833 + $0x38] sm:$0xf]
    %v1849 = vld [vmem:[%s1833 + $0x3c] sm:$0xf]
    %v1866 = vunpack.c.l.b16 %v1834
    %v1867 = vunpack.c.l.b16 %v1835
    %v1868 = vunpack.c.l.b16 %v1836
    %v1869 = vunpack.c.l.b16 %v1837
    %v1870 = vunpack.c.l.b16 %v1838
    %v1871 = vunpack.c.l.b16 %v1839
    %v1872 = vunpack.c.l.b16 %v1840
    %v1873 = vunpack.c.l.b16 %v1841
    %v1874 = vunpack.c.l.b16 %v1842
    %v1875 = vunpack.c.l.b16 %v1843
    %v1876 = vunpack.c.l.b16 %v1844
    %v1877 = vunpack.c.l.b16 %v1845
    %v1878 = vunpack.c.l.b16 %v1846
    %v1879 = vunpack.c.l.b16 %v1847
    %v1880 = vunpack.c.l.b16 %v1848
    %v1881 = vunpack.c.l.b16 %v1849
    %v1882 = vpack.c.b16 %v1867, %v1866
    %v1883 = vpack.c.b16 %v1869, %v1868
    %v1884 = vpack.c.b16 %v1871, %v1870
    %v1885 = vpack.c.b16 %v1873, %v1872
    %v1886 = vpack.c.b16 %v1875, %v1874
    %v1887 = vpack.c.b16 %v1877, %v1876
    %v1888 = vpack.c.b16 %v1879, %v1878
    %v1889 = vpack.c.b16 %v1881, %v1880
    %1898 = vmatprep.subr.bf16.mxu0 0
    %1899 = vmatpush1.bf16.msra.mxu0 %v1889
    %1900 = vmatprep.subr.bf16.mxu0 0
    %1901 = vmatpush1.bf16.msra.mxu0 %v1888
    %1902 = vmatprep.subr.bf16.mxu0 0
    %1903 = vmatpush1.bf16.msra.mxu0 %v1887
    %1904 = vmatprep.subr.bf16.mxu0 0
    %1905 = vmatpush1.bf16.msra.mxu0 %v1886
    %1906 = vmatprep.subr.bf16.mxu0 0
    %1907 = vmatpush1.bf16.msra.mxu0 %v1885
    %1908 = vmatprep.subr.bf16.mxu0 0
    %1909 = vmatpush1.bf16.msra.mxu0 %v1884
    %1910 = vmatprep.subr.bf16.mxu0 0
    %1911 = vmatpush1.bf16.msra.mxu0 %v1883
    %1912 = vmatprep.subr.bf16.mxu0 0
    %1913 = vmatpush1.bf16.msra.mxu0 %v1882
    %1914 = vmatprep.subr.bf16.mxu0 0
    %1915 = vmatpush2.bf16.msra.mxu0 0
    %1916 = vmatprep.subr.bf16.mxu0 0
    %1917 = vmatpush2.bf16.msra.mxu0 0
    %1918 = vmatprep.subr.bf16.mxu0 0
    %1919 = vmatpush2.bf16.msra.mxu0 0
    %1920 = vmatprep.subr.bf16.mxu0 0
    %1921 = vmatpush2.bf16.msra.mxu0 0
    %1922 = vmatprep.subr.bf16.mxu0 0
    %1923 = vmatpush2.bf16.msra.mxu0 0
    %1924 = vmatprep.subr.bf16.mxu0 0
    %1925 = vmatpush2.bf16.msra.mxu0 0
    %1926 = vmatprep.subr.bf16.mxu0 0
    %1927 = vmatpush2.bf16.msra.mxu0 0
    %1928 = vmatprep.subr.bf16.mxu0 0
    %1929 = vmatpush2.bf16.msra.mxu0 0
    %1930 = vmatprep.mubr.bf16.mxu0 0
    %1931 = vmatmul.mubr.bf16.gmra.mxu0 %v1832
    %v1932 = vpop.f32.mrf.mxu0
    %v1933 = vadd.f32 0.0, %v1932
    %v1934 = vpop.f32.mrf.mxu0
    %v1935 = vpop.f32.mrf.mxu0
    %v1936 = vadd.f32 0.0, %v1935
    %v1937 = vpop.f32.mrf.mxu0
    %1938 = vdwg.mxu0
    %v1939 = vadd.f32 %v1710, %v1933
    %v1940 = vadd.f32 %v1711, %v1936
    %1942 = vrot.lane.b32.xlu0 %v1709, 96
    %v1943 = vpop.permute.xlu0 %1942
    %v1945 = vadd.f32 %v1939, %v1943
    %v1946 = vadd.f32 %v1940, %v1943
    %v1947 = vsel %vm212, %v1945, 0.0
    %1948 = vadd.xlane.f32.xlu0 %v1947
    %v1949 = vpop.xlane.xlu0 %1948
    %v1950 = vsel %vm212, %v1946, 0.0
    %1951 = vadd.xlane.f32.xlu0 %v1950
    %v1952 = vpop.xlane.xlu0 %1951
    %v1953 = vmul.f32 %v1949, %v219
    %v1954 = vmul.f32 %v1952, %v219
    %v1955 = vsub.f32 %v1945, %v1953
    %v1956 = vsub.f32 %v1946, %v1954
    %v1957 = vmul.f32 %v1955, %v1955
    %v1958 = vmul.f32 %v1956, %v1956
    %v1959 = vsel %vm212, %v1957, 0.0
    %1960 = vadd.xlane.f32.xlu0 %v1959
    %v1961 = vpop.xlane.xlu0 %1960
    %v1962 = vsel %vm212, %v1958, 0.0
    %1963 = vadd.xlane.f32.xlu0 %v1962
    %v1964 = vpop.xlane.xlu0 %1963
    %v1965 = vmul.f32 %v1961, %v219
    %v1966 = vmul.f32 %v1964, %v219
    %v1967 = vadd.f32 %v1965, 1e-05
    %v1968 = vadd.f32 %v1966, 1e-05
    %v1969 = vrsqrt.pop %v1967
    %v1970 = vrsqrt.pop %v1968
    %v1971 = vmul.f32 %v1955, %v1969
    %v1972 = vmul.f32 %v1956, %v1970
    %v1973 = vlaneseq
    %v1974 = vshrl.u32 %v1973, 7
    %v1975 = vsub.s32 0, %v1974
    %v1976 = vrot.slane %v211, %v1975
    %v1977 = vmul.f32 %v1971, %v1976
    %v1978 = vmul.f32 %v1972, %v1976
    %1980 = vrot.lane.b32.xlu0 %v1976, 96
    %v1981 = vpop.permute.xlu0 %1980
    %v1983 = vadd.f32 %v1977, %v1981
    %v1984 = vadd.f32 %v1978, %v1981
    %v1985 = vpack.c.bf16 %v1984, %v1983
    %v1986 = vld [vmem:[%s9] sm:$0xf]
    %v1987 = vld [vmem:[%s9 + $0x4] sm:$0xf]
    %v1988 = vld [vmem:[%s9 + $0x8] sm:$0xf]
    %v1989 = vld [vmem:[%s9 + $0xc] sm:$0xf]
    %v1994 = vunpack.c.l.b16 %v1986
    %v1995 = vunpack.c.l.b16 %v1987
    %v1996 = vunpack.c.l.b16 %v1988
    %v1997 = vunpack.c.l.b16 %v1989
    %v1998 = vpack.c.b16 %v1995, %v1994
    %v1999 = vpack.c.b16 %v1997, %v1996
    %v2003 = vsel %vm212, %v1985, 0
    %2005 = vmatprep.subr.bf16.mxu0 0
    %2006 = vmatpush1.bf16.msra.mxu0 0
    %2007 = vmatprep.subr.bf16.mxu0 0
    %2008 = vmatpush1.bf16.msra.mxu0 0
    %2009 = vmatprep.subr.bf16.mxu0 0
    %2010 = vmatpush1.bf16.msra.mxu0 0
    %2011 = vmatprep.subr.bf16.mxu0 0
    %2012 = vmatpush1.bf16.msra.mxu0 0
    %2013 = vmatprep.subr.bf16.mxu0 0
    %2014 = vmatpush1.bf16.msra.mxu0 0
    %2015 = vmatprep.subr.bf16.mxu0 0
    %2016 = vmatpush1.bf16.msra.mxu0 0
    %2017 = vmatprep.subr.bf16.mxu0 0
    %2018 = vmatpush1.bf16.msra.mxu0 %v1999
    %2019 = vmatprep.subr.bf16.mxu0 0
    %2020 = vmatpush1.bf16.msra.mxu0 %v1998
    %2021 = vmatprep.subr.bf16.mxu0 0
    %2022 = vmatpush2.bf16.msra.mxu0 0
    %2023 = vmatprep.subr.bf16.mxu0 0
    %2024 = vmatpush2.bf16.msra.mxu0 0
    %2025 = vmatprep.subr.bf16.mxu0 0
    %2026 = vmatpush2.bf16.msra.mxu0 0
    %2027 = vmatprep.subr.bf16.mxu0 0
    %2028 = vmatpush2.bf16.msra.mxu0 0
    %2029 = vmatprep.subr.bf16.mxu0 0
    %2030 = vmatpush2.bf16.msra.mxu0 0
    %2031 = vmatprep.subr.bf16.mxu0 0
    %2032 = vmatpush2.bf16.msra.mxu0 0
    %2033 = vmatprep.subr.bf16.mxu0 0
    %2034 = vmatpush2.bf16.msra.mxu0 0
    %2035 = vmatprep.subr.bf16.mxu0 0
    %2036 = vmatpush2.bf16.msra.mxu0 0
    %2037 = vmatprep.mubr.bf16.mxu0 0
    %2038 = vmatmul.mubr.bf16.gmra.mxu0 %v2003
    %v2039 = vpop.f32.mrf.mxu0
    %v2040 = vadd.f32 0.0, %v2039
    %v2041 = vpop.f32.mrf.mxu0
    %v2042 = vpop.f32.mrf.mxu0
    %v2043 = vadd.f32 0.0, %v2042
    %v2044 = vpop.f32.mrf.mxu0
    %2045 = vdwg.mxu0
    %2046 = vst [vmem:[#allocation2] sm:$0xff] %v2040
    %2047 = vst [vmem:[#allocation2 + $0x8] sm:$0xff] %v2043
    // Predicated region
    $region42: #{gpt_lm_forward.1} parent=1 // pred_check
      _
    $region43: #{gpt_lm_forward.1} parent=1 // pred_check_branch
      %2049 = sbr.rel (0) target = $region45
    $region44: #{gpt_lm_forward.1} parent=1 // pred_region
      %s2051 = ssub.s32 256, 256
      %2052 = vsyncadd [#allocation3], %s2051
      %s2053 = sshll.u32 [#allocation2], 4
      %s2054 = int_to_ptr.vmem [resolvable:$true] %s2053
      %2059 = dma.vmem_to_hbm [thread:$0]  %s2054, 256, %s10, [#allocation3], 128, 128, 8
    $region45: #{gpt_lm_forward.1} parent=1 // pred_fallthru
      _
    // Predicated region
    $region46: #{gpt_lm_forward.1} parent=1 // pred_check
      _
    $region47: #{gpt_lm_forward.1} parent=1 // pred_check_branch
      %2061 = sbr.rel (0) target = $region49
    $region48: #{gpt_lm_forward.1} parent=1 // pred_region
      %2062 = dma.done [#allocation3], 256
    $region49: #{gpt_lm_forward.1} parent=1 // pred_fallthru
      _
    %2063 = vsyncpa [#allocation3], 1

</llo_original>
